<compile_context>
chip_gen: v7x
topology: tpu7x:2x2x1
jax: 0.10.0
libtpu: 0.0.40
codegen_flags: <defaults>
</compile_context>

<pallas_src>
import functools
import math

import jax
import jax.numpy as jnp
from jax.experimental import pallas as pl
from jax.experimental.pallas import tpu as pltpu


# ------------------------------ in-kernel helpers ----------------------------

def _layernorm(z, g, b, eps=1e-5):
    mean = jnp.mean(z, axis=-1, keepdims=True)
    var = jnp.mean((z - mean) ** 2, axis=-1, keepdims=True)
    return (z - mean) * jax.lax.rsqrt(var + eps) * g + b


def _mha_into(attn_ref, q, k, v, n_heads, dh):
    """Per-head attention; q/k/v are bf16 (q already carries 1/sqrt(dh)).

    Each head's (Lq, dh) output is written straight into its lane slice of the
    bf16 VMEM scratch `attn_ref` (no concat -> bounded live ranges).  Scores
    contract the head dim directly (no K transpose / XLU vxpose).
    """
    for h in range(n_heads):
        lo = h * dh
        qh = q[:, lo:lo + dh]
        kh = k[:, lo:lo + dh]
        vh = v[:, lo:lo + dh]
        s = jax.lax.dot_general(qh, kh, (((1,), (1,)), ((), ())),
                                preferred_element_type=jnp.float32)   # (Lq, Lk)
        m = jnp.max(s, axis=-1, keepdims=True)
        p = jnp.exp(s - m)
        inv = pl.reciprocal(jnp.sum(p, axis=-1, keepdims=True), approx=True)
        o = jnp.dot(p.astype(jnp.bfloat16), vh,
                    preferred_element_type=jnp.float32)               # (Lq, dh)
        attn_ref[:, lo:lo + dh] = (o * inv).astype(attn_ref.dtype)


# Packed bias / LayerNorm-parameter row layout (one (16, W) f32 array).
_ROW_BQKV, _ROW_BO1, _ROW_LN1G, _ROW_LN1B = 0, 1, 2, 3
_ROW_BQ, _ROW_BKV, _ROW_BO2, _ROW_LN2G, _ROW_LN2B = 4, 5, 6, 7, 8
_ROW_B1, _ROW_B2, _ROW_LN3G, _ROW_LN3B = 9, 10, 11, 12


# -------------------------------- fused kernel -------------------------------

def decoder_layer_kernel(x_ref, mem_ref,
                         wqkv_ref, wo1_ref, wq_ref, wkv_ref, wo2_ref,
                         w1_ref, w2_ref, vec_ref,
                         o_ref, attn_scr, *, n_heads):
    # grid: (B,) — one batch element per step; all weights resident.
    x = x_ref[0]                                                      # (Lt, D) f32
    mem = mem_ref[0]                                                  # (Lm, D) f32
    D = x.shape[-1]
    dh = D // n_heads
    scale = 1.0 / math.sqrt(dh)
    vec = vec_ref[...]                                                # (16, W) f32
    bf = jnp.bfloat16

    # ---- stage 1: self-attention -> out-proj -> residual -> LayerNorm1 ------
    qkv = (jnp.dot(x.astype(bf), wqkv_ref[...],
                   preferred_element_type=jnp.float32)
           + vec[_ROW_BQKV:_ROW_BQKV + 1, :3 * D])                    # (Lt, 3D)
    q = (qkv[:, 0 * D:1 * D] * scale).astype(bf)
    k = qkv[:, 1 * D:2 * D].astype(bf)
    v = qkv[:, 2 * D:3 * D].astype(bf)
    _mha_into(attn_scr, q, k, v, n_heads, dh)
    proj = (jnp.dot(attn_scr[...], wo1_ref[...],
                    preferred_element_type=jnp.float32)
            + vec[_ROW_BO1:_ROW_BO1 + 1, :D])
    x1 = _layernorm(x + proj,
                    vec[_ROW_LN1G:_ROW_LN1G + 1, :D],
                    vec[_ROW_LN1B:_ROW_LN1B + 1, :D])                 # (Lt, D) f32

    # ---- stage 2: cross-attention -> out-proj -> residual -> LayerNorm2 -----
    q = ((jnp.dot(x1.astype(bf), wq_ref[...],
                  preferred_element_type=jnp.float32)
          + vec[_ROW_BQ:_ROW_BQ + 1, :D]) * scale).astype(bf)
    kv = (jnp.dot(mem.astype(bf), wkv_ref[...],
                  preferred_element_type=jnp.float32)
          + vec[_ROW_BKV:_ROW_BKV + 1, :2 * D])                       # (Lm, 2D)
    k = kv[:, :D].astype(bf)
    v = kv[:, D:].astype(bf)
    _mha_into(attn_scr, q, k, v, n_heads, dh)
    proj = (jnp.dot(attn_scr[...], wo2_ref[...],
                    preferred_element_type=jnp.float32)
            + vec[_ROW_BO2:_ROW_BO2 + 1, :D])
    x2 = _layernorm(x1 + proj,
                    vec[_ROW_LN2G:_ROW_LN2G + 1, :D],
                    vec[_ROW_LN2B:_ROW_LN2B + 1, :D])                 # (Lt, D) f32

    # ---- stage 3: FFN (1x1 convs) + ReLU -> residual -> LayerNorm3 ----------
    Dffn = w1_ref.shape[1]
    h = (jnp.dot(x2.astype(bf), w1_ref[...],
                 preferred_element_type=jnp.float32)
         + vec[_ROW_B1:_ROW_B1 + 1, :Dffn])
    h = jnp.maximum(h, 0.0).astype(bf)                                # activation='relu'
    y = (jnp.dot(h, w2_ref[...], preferred_element_type=jnp.float32)
         + vec[_ROW_B2:_ROW_B2 + 1, :D])
    o_ref[0] = _layernorm(x2 + y,
                          vec[_ROW_LN3G:_ROW_LN3G + 1, :D],
                          vec[_ROW_LN3B:_ROW_LN3B + 1, :D])


# ---------------------------------- wrapper -----------------------------------

def _pack_vec(params, D, Dffn):
    """Pack all biases + LayerNorm params into one lane-padded f32 array."""
    W = max(3 * D, Dffn)
    W = ((W + 127) // 128) * 128
    rows = [
        (_ROW_BQKV, params["self_attn"]["bqkv"]),
        (_ROW_BO1, params["self_attn"]["bo"]),
        (_ROW_LN1G, params["ln1_g"]), (_ROW_LN1B, params["ln1_b"]),
        (_ROW_BQ, params["cross_attn"]["bq"]),
        (_ROW_BKV, params["cross_attn"]["bkv"]),
        (_ROW_BO2, params["cross_attn"]["bo"]),
        (_ROW_LN2G, params["ln2_g"]), (_ROW_LN2B, params["ln2_b"]),
        (_ROW_B1, params["b1"]), (_ROW_B2, params["b2"]),
        (_ROW_LN3G, params["ln3_g"]), (_ROW_LN3B, params["ln3_b"]),
    ]
    vec = jnp.zeros((16, W), jnp.float32)
    for r, val in rows:
        vec = vec.at[r, :val.shape[0]].set(val.astype(jnp.float32))
    return vec


def decoder_layer_forward(tgt, memory, params, n_heads):
    B, Lt, D = tgt.shape
    Lm = memory.shape[1]
    Dffn = params["w1"].shape[1]
    bf = jnp.bfloat16

    # bf16 MXU operands (accumulation stays f32 inside the kernel).
    wqkv = params["self_attn"]["wqkv"].astype(bf)
    wo1 = params["self_attn"]["wo"].astype(bf)
    wq = params["cross_attn"]["wq"].astype(bf)
    wkv = params["cross_attn"]["wkv"].astype(bf)
    wo2 = params["cross_attn"]["wo"].astype(bf)
    w1 = params["w1"].astype(bf)
    w2 = params["w2"].astype(bf)
    vec = _pack_vec(params, D, Dffn)

    kernel = functools.partial(decoder_layer_kernel, n_heads=n_heads)
    const2 = lambda b: (0, 0)
    return pl.pallas_call(
        kernel,
        out_shape=jax.ShapeDtypeStruct((B, Lt, D), jnp.float32),
        grid=(B,),
        in_specs=[
            pl.BlockSpec((1, Lt, D), lambda b: (b, 0, 0)),      # tgt
            pl.BlockSpec((1, Lm, D), lambda b: (b, 0, 0)),      # memory
            pl.BlockSpec((D, 3 * D), const2),                   # wqkv (self)
            pl.BlockSpec((D, D), const2),                       # wo   (self)
            pl.BlockSpec((D, D), const2),                       # wq   (cross)
            pl.BlockSpec((D, 2 * D), const2),                   # wkv  (cross)
            pl.BlockSpec((D, D), const2),                       # wo   (cross)
            pl.BlockSpec((D, Dffn), const2),                    # conv1 weight
            pl.BlockSpec((Dffn, D), const2),                    # conv2 weight
            pl.BlockSpec(vec.shape, const2),                    # packed biases / LN params
        ],
        out_specs=pl.BlockSpec((1, Lt, D), lambda b: (b, 0, 0)),
        scratch_shapes=[pltpu.VMEM((Lt, D), jnp.bfloat16)],     # per-head attn output slab
        compiler_params=pltpu.CompilerParams(
            dimension_semantics=("parallel",),
            vmem_limit_bytes=32 * 1024 * 1024),
    )(tgt, memory, wqkv, wo1, wq, wkv, wo2, w1, w2, vec)


# ------------------------------ parameter init --------------------------------

def make_params(key, d_model, d_ffn, n_heads):
    ks = jax.random.split(key, 8)
    s = 0.05
    bf = jnp.bfloat16

    def self_attn_params(k):
        kq, kk, kv, ko, kb = jax.random.split(k, 5)
        wq = jax.random.normal(kq, (d_model, d_model), jnp.float32) * s
        wk = jax.random.normal(kk, (d_model, d_model), jnp.float32) * s
        wv = jax.random.normal(kv, (d_model, d_model), jnp.float32) * s
        wo = jax.random.normal(ko, (d_model, d_model), jnp.float32) * s
        bqkv = jax.random.normal(kb, (3 * d_model,), jnp.float32) * s
        return dict(wqkv=jnp.concatenate([wq, wk, wv], axis=1).astype(bf),  # (D, 3D)
                    bqkv=bqkv,
                    wo=wo.astype(bf), bo=jnp.zeros((d_model,), jnp.float32))

    def cross_attn_params(k):
        kq, kk, kv, ko, kb = jax.random.split(k, 5)
        wq = jax.random.normal(kq, (d_model, d_model), jnp.float32) * s
        wk = jax.random.normal(kk, (d_model, d_model), jnp.float32) * s
        wv = jax.random.normal(kv, (d_model, d_model), jnp.float32) * s
        wo = jax.random.normal(ko, (d_model, d_model), jnp.float32) * s
        b = jax.random.normal(kb, (3 * d_model,), jnp.float32) * s
        return dict(wq=wq.astype(bf), bq=b[:d_model],
                    wkv=jnp.concatenate([wk, wv], axis=1).astype(bf),       # (D, 2D)
                    bkv=b[d_model:],
                    wo=wo.astype(bf), bo=jnp.zeros((d_model,), jnp.float32))

    return dict(
        self_attn=self_attn_params(ks[0]),
        cross_attn=cross_attn_params(ks[1]),
        # conv1 (1x1): stored as (d_model, d_ffn) so it is x @ W per position
        w1=(jax.random.normal(ks[2], (d_model, d_ffn), jnp.float32) * s).astype(bf),
        b1=jax.random.normal(ks[3], (d_ffn,), jnp.float32) * s,
        # conv2 (1x1): stored as (d_ffn, d_model)
        w2=(jax.random.normal(ks[4], (d_ffn, d_model), jnp.float32) * s).astype(bf),
        b2=jax.random.normal(ks[5], (d_model,), jnp.float32) * s,
        ln1_g=jnp.ones((d_model,), jnp.float32), ln1_b=jnp.zeros((d_model,), jnp.float32),
        ln2_g=jnp.ones((d_model,), jnp.float32), ln2_b=jnp.zeros((d_model,), jnp.float32),
        ln3_g=jnp.ones((d_model,), jnp.float32), ln3_b=jnp.zeros((d_model,), jnp.float32),
    )


if __name__ == "__main__":
    B, L_TGT, L_MEM = 2, 8, 8
    D_MODEL, N_HEADS = 32, 4
    D_FFN = 4 * D_MODEL

    key = jax.random.PRNGKey(0)
    k_tgt, k_mem, k_par = jax.random.split(key, 3)

    tgt = jax.random.normal(k_tgt, (B, L_TGT, D_MODEL), jnp.float32)
    memory = jax.random.normal(k_mem, (B, L_MEM, D_MODEL), jnp.float32)
    params = make_params(k_par, D_MODEL, D_FFN, N_HEADS)

    out = decoder_layer_forward(tgt, memory, params, N_HEADS)
    out = jax.block_until_ready(out)
    assert out.shape == (B, L_TGT, D_MODEL)
    assert jnp.all(jnp.isfinite(out))
    print("KERNEL_OK")
</pallas_src>

<mosaic_0001>
module attributes {stable_mosaic.version = 11 : i64} {
  func.func @decoder_layer_kernel(%arg0: i32, %arg1: memref<1x8x32xf32, #tpu.memory_space<vmem>>, %arg2: memref<1x8x32xf32, #tpu.memory_space<vmem>>, %arg3: memref<32x96xbf16, #tpu.memory_space<vmem>>, %arg4: memref<32x32xbf16, #tpu.memory_space<vmem>>, %arg5: memref<32x32xbf16, #tpu.memory_space<vmem>>, %arg6: memref<32x64xbf16, #tpu.memory_space<vmem>>, %arg7: memref<32x32xbf16, #tpu.memory_space<vmem>>, %arg8: memref<32x128xbf16, #tpu.memory_space<vmem>>, %arg9: memref<128x32xbf16, #tpu.memory_space<vmem>>, %arg10: memref<16x128xf32, #tpu.memory_space<vmem>>, %arg11: memref<1x8x32xf32, #tpu.memory_space<vmem>>, %arg12: memref<8x32xbf16, #tpu.memory_space<vmem>>) attributes {dimension_semantics = [#tpu.dimension_semantics<parallel>], iteration_bounds = array<i64: 2>, scalar_prefetch = 0 : i64, scratch_operands = 1 : i64, tpu.core_type = #tpu.core_type<tc>, window_params = [{transform_indices = @transform_0, window_bounds = array<i64: 1, 8, 32>}, {transform_indices = @transform_1, window_bounds = array<i64: 1, 8, 32>}, {pipeline_mode = #tpu.pipeline_mode<synchronous>, transform_indices = @transform_2, window_bounds = array<i64: 32, 96>}, {pipeline_mode = #tpu.pipeline_mode<synchronous>, transform_indices = @transform_3, window_bounds = array<i64: 32, 32>}, {pipeline_mode = #tpu.pipeline_mode<synchronous>, transform_indices = @transform_4, window_bounds = array<i64: 32, 32>}, {pipeline_mode = #tpu.pipeline_mode<synchronous>, transform_indices = @transform_5, window_bounds = array<i64: 32, 64>}, {pipeline_mode = #tpu.pipeline_mode<synchronous>, transform_indices = @transform_6, window_bounds = array<i64: 32, 32>}, {pipeline_mode = #tpu.pipeline_mode<synchronous>, transform_indices = @transform_7, window_bounds = array<i64: 32, 128>}, {pipeline_mode = #tpu.pipeline_mode<synchronous>, transform_indices = @transform_8, window_bounds = array<i64: 128, 32>}, {pipeline_mode = #tpu.pipeline_mode<synchronous>, transform_indices = @transform_9, window_bounds = array<i64: 16, 128>}, {transform_indices = @transform_10, window_bounds = array<i64: 1, 8, 32>}]} {
    %c0 = arith.constant 0 : index
    %c0_0 = arith.constant 0 : index
    %c0_1 = arith.constant 0 : index
    %0 = vector.load %arg1[%c0, %c0_0, %c0_1] : memref<1x8x32xf32, #tpu.memory_space<vmem>>, vector<1x8x32xf32>
    %1 = vector.shape_cast %0 : vector<1x8x32xf32> to vector<8x32xf32>
    %c0_2 = arith.constant 0 : index
    %c0_3 = arith.constant 0 : index
    %c0_4 = arith.constant 0 : index
    %2 = vector.load %arg2[%c0_2, %c0_3, %c0_4] : memref<1x8x32xf32, #tpu.memory_space<vmem>>, vector<1x8x32xf32>
    %3 = vector.shape_cast %2 : vector<1x8x32xf32> to vector<8x32xf32>
    %c0_5 = arith.constant 0 : index
    %c0_6 = arith.constant 0 : index
    %4 = vector.load %arg10[%c0_5, %c0_6] : memref<16x128xf32, #tpu.memory_space<vmem>>, vector<16x128xf32>
    %5 = arith.truncf %1 : vector<8x32xf32> to vector<8x32xbf16>
    %c0_7 = arith.constant 0 : index
    %c0_8 = arith.constant 0 : index
    %6 = vector.load %arg3[%c0_7, %c0_8] : memref<32x96xbf16, #tpu.memory_space<vmem>>, vector<32x96xbf16>
    %cst = arith.constant dense<0.000000e+00> : vector<8x96xf32>
    %7 = tpu.matmul %5, %6, %cst {dimension_numbers = #tpu.dot_dimension_numbers<[1], [0], [0], [1], [0, 0, 1, 1], [], []>} : vector<8x32xbf16>, vector<32x96xbf16>, vector<8x96xf32> -> vector<8x96xf32>
    %8 = vector.extract_strided_slice %4 {offsets = [0, 0], sizes = [1, 96], strides = [1, 1]} : vector<16x128xf32> to vector<1x96xf32>
    %9 = vector.broadcast %8 : vector<1x96xf32> to vector<8x96xf32>
    %10 = arith.addf %7, %9 : vector<8x96xf32>
    %11 = vector.extract_strided_slice %10 {offsets = [0, 0], sizes = [8, 32], strides = [1, 1]} : vector<8x96xf32> to vector<8x32xf32>
    %cst_9 = arith.constant 0.353553385 : f32
    %12 = vector.broadcast %cst_9 : f32 to vector<8x32xf32>
    %13 = arith.mulf %11, %12 : vector<8x32xf32>
    %14 = arith.truncf %13 : vector<8x32xf32> to vector<8x32xbf16>
    %15 = vector.extract_strided_slice %10 {offsets = [0, 32], sizes = [8, 32], strides = [1, 1]} : vector<8x96xf32> to vector<8x32xf32>
    %16 = arith.truncf %15 : vector<8x32xf32> to vector<8x32xbf16>
    %17 = vector.extract_strided_slice %10 {offsets = [0, 64], sizes = [8, 32], strides = [1, 1]} : vector<8x96xf32> to vector<8x32xf32>
    %18 = arith.truncf %17 : vector<8x32xf32> to vector<8x32xbf16>
    %19 = vector.extract_strided_slice %14 {offsets = [0, 0], sizes = [8, 8], strides = [1, 1]} : vector<8x32xbf16> to vector<8x8xbf16>
    %20 = vector.extract_strided_slice %16 {offsets = [0, 0], sizes = [8, 8], strides = [1, 1]} : vector<8x32xbf16> to vector<8x8xbf16>
    %21 = vector.extract_strided_slice %18 {offsets = [0, 0], sizes = [8, 8], strides = [1, 1]} : vector<8x32xbf16> to vector<8x8xbf16>
    %cst_10 = arith.constant dense<0.000000e+00> : vector<8x8xf32>
    %22 = tpu.matmul %19, %20, %cst_10 {dimension_numbers = #tpu.dot_dimension_numbers<[1], [1], [0], [0], [0, 0, 1, 0], [], []>} : vector<8x8xbf16>, vector<8x8xbf16>, vector<8x8xf32> -> vector<8x8xf32>
    %cst_11 = arith.constant dense<0xFF800000> : vector<8xf32>
    %23 = vector.multi_reduction <maximumf>, %22, %cst_11 [1] : vector<8x8xf32> to vector<8xf32>
    %24 = vector.shape_cast %23 : vector<8xf32> to vector<8x1xf32>
    %25 = vector.broadcast %24 : vector<8x1xf32> to vector<8x8xf32>
    %26 = arith.subf %22, %25 : vector<8x8xf32>
    %27 = math.exp %26 : vector<8x8xf32>
    %cst_12 = arith.constant dense<0.000000e+00> : vector<8xf32>
    %28 = vector.multi_reduction <add>, %27, %cst_12 [1] : vector<8x8xf32> to vector<8xf32>
    %29 = vector.shape_cast %28 : vector<8xf32> to vector<8x1xf32>
    %30 = tpu.reciprocal %29 {approx = true} : vector<8x1xf32> -> vector<8x1xf32>
    %31 = arith.truncf %27 : vector<8x8xf32> to vector<8x8xbf16>
    %cst_13 = arith.constant dense<0.000000e+00> : vector<8x8xf32>
    %32 = tpu.matmul %31, %21, %cst_13 {dimension_numbers = #tpu.dot_dimension_numbers<[1], [0], [0], [1], [0, 0, 1, 1], [], []>} : vector<8x8xbf16>, vector<8x8xbf16>, vector<8x8xf32> -> vector<8x8xf32>
    %33 = vector.broadcast %30 : vector<8x1xf32> to vector<8x8xf32>
    %34 = arith.mulf %32, %33 : vector<8x8xf32>
    %35 = arith.truncf %34 : vector<8x8xf32> to vector<8x8xbf16>
    %c0_14 = arith.constant 0 : index
    %c0_15 = arith.constant 0 : index
    %36 = vector.load %arg12[%c0_14, %c0_15] : memref<8x32xbf16, #tpu.memory_space<vmem>>, vector<8x8xbf16>
    tpu.vector_store %arg12[%c0_14, %c0_15], %35 {strides = array<i32>} : memref<8x32xbf16, #tpu.memory_space<vmem>>, vector<8x8xbf16>,
    %37 = vector.extract_strided_slice %14 {offsets = [0, 8], sizes = [8, 8], strides = [1, 1]} : vector<8x32xbf16> to vector<8x8xbf16>
    %38 = vector.extract_strided_slice %16 {offsets = [0, 8], sizes = [8, 8], strides = [1, 1]} : vector<8x32xbf16> to vector<8x8xbf16>
    %39 = vector.extract_strided_slice %18 {offsets = [0, 8], sizes = [8, 8], strides = [1, 1]} : vector<8x32xbf16> to vector<8x8xbf16>
    %cst_16 = arith.constant dense<0.000000e+00> : vector<8x8xf32>
    %40 = tpu.matmul %37, %38, %cst_16 {dimension_numbers = #tpu.dot_dimension_numbers<[1], [1], [0], [0], [0, 0, 1, 0], [], []>} : vector<8x8xbf16>, vector<8x8xbf16>, vector<8x8xf32> -> vector<8x8xf32>
    %cst_17 = arith.constant dense<0xFF800000> : vector<8xf32>
    %41 = vector.multi_reduction <maximumf>, %40, %cst_17 [1] : vector<8x8xf32> to vector<8xf32>
    %42 = vector.shape_cast %41 : vector<8xf32> to vector<8x1xf32>
    %43 = vector.broadcast %42 : vector<8x1xf32> to vector<8x8xf32>
    %44 = arith.subf %40, %43 : vector<8x8xf32>
    %45 = math.exp %44 : vector<8x8xf32>
    %cst_18 = arith.constant dense<0.000000e+00> : vector<8xf32>
    %46 = vector.multi_reduction <add>, %45, %cst_18 [1] : vector<8x8xf32> to vector<8xf32>
    %47 = vector.shape_cast %46 : vector<8xf32> to vector<8x1xf32>
    %48 = tpu.reciprocal %47 {approx = true} : vector<8x1xf32> -> vector<8x1xf32>
    %49 = arith.truncf %45 : vector<8x8xf32> to vector<8x8xbf16>
    %cst_19 = arith.constant dense<0.000000e+00> : vector<8x8xf32>
    %50 = tpu.matmul %49, %39, %cst_19 {dimension_numbers = #tpu.dot_dimension_numbers<[1], [0], [0], [1], [0, 0, 1, 1], [], []>} : vector<8x8xbf16>, vector<8x8xbf16>, vector<8x8xf32> -> vector<8x8xf32>
    %51 = vector.broadcast %48 : vector<8x1xf32> to vector<8x8xf32>
    %52 = arith.mulf %50, %51 : vector<8x8xf32>
    %53 = arith.truncf %52 : vector<8x8xf32> to vector<8x8xbf16>
    %c0_20 = arith.constant 0 : index
    %c8 = arith.constant 8 : index
    %54 = vector.load %arg12[%c0_20, %c8] : memref<8x32xbf16, #tpu.memory_space<vmem>>, vector<8x8xbf16>
    tpu.vector_store %arg12[%c0_20, %c8], %53 {strides = array<i32>} : memref<8x32xbf16, #tpu.memory_space<vmem>>, vector<8x8xbf16>,
    %55 = vector.extract_strided_slice %14 {offsets = [0, 16], sizes = [8, 8], strides = [1, 1]} : vector<8x32xbf16> to vector<8x8xbf16>
    %56 = vector.extract_strided_slice %16 {offsets = [0, 16], sizes = [8, 8], strides = [1, 1]} : vector<8x32xbf16> to vector<8x8xbf16>
    %57 = vector.extract_strided_slice %18 {offsets = [0, 16], sizes = [8, 8], strides = [1, 1]} : vector<8x32xbf16> to vector<8x8xbf16>
    %cst_21 = arith.constant dense<0.000000e+00> : vector<8x8xf32>
    %58 = tpu.matmul %55, %56, %cst_21 {dimension_numbers = #tpu.dot_dimension_numbers<[1], [1], [0], [0], [0, 0, 1, 0], [], []>} : vector<8x8xbf16>, vector<8x8xbf16>, vector<8x8xf32> -> vector<8x8xf32>
    %cst_22 = arith.constant dense<0xFF800000> : vector<8xf32>
    %59 = vector.multi_reduction <maximumf>, %58, %cst_22 [1] : vector<8x8xf32> to vector<8xf32>
    %60 = vector.shape_cast %59 : vector<8xf32> to vector<8x1xf32>
    %61 = vector.broadcast %60 : vector<8x1xf32> to vector<8x8xf32>
    %62 = arith.subf %58, %61 : vector<8x8xf32>
    %63 = math.exp %62 : vector<8x8xf32>
    %cst_23 = arith.constant dense<0.000000e+00> : vector<8xf32>
    %64 = vector.multi_reduction <add>, %63, %cst_23 [1] : vector<8x8xf32> to vector<8xf32>
    %65 = vector.shape_cast %64 : vector<8xf32> to vector<8x1xf32>
    %66 = tpu.reciprocal %65 {approx = true} : vector<8x1xf32> -> vector<8x1xf32>
    %67 = arith.truncf %63 : vector<8x8xf32> to vector<8x8xbf16>
    %cst_24 = arith.constant dense<0.000000e+00> : vector<8x8xf32>
    %68 = tpu.matmul %67, %57, %cst_24 {dimension_numbers = #tpu.dot_dimension_numbers<[1], [0], [0], [1], [0, 0, 1, 1], [], []>} : vector<8x8xbf16>, vector<8x8xbf16>, vector<8x8xf32> -> vector<8x8xf32>
    %69 = vector.broadcast %66 : vector<8x1xf32> to vector<8x8xf32>
    %70 = arith.mulf %68, %69 : vector<8x8xf32>
    %71 = arith.truncf %70 : vector<8x8xf32> to vector<8x8xbf16>
    %c0_25 = arith.constant 0 : index
    %c16 = arith.constant 16 : index
    %72 = vector.load %arg12[%c0_25, %c16] : memref<8x32xbf16, #tpu.memory_space<vmem>>, vector<8x8xbf16>
    tpu.vector_store %arg12[%c0_25, %c16], %71 {strides = array<i32>} : memref<8x32xbf16, #tpu.memory_space<vmem>>, vector<8x8xbf16>,
    %73 = vector.extract_strided_slice %14 {offsets = [0, 24], sizes = [8, 8], strides = [1, 1]} : vector<8x32xbf16> to vector<8x8xbf16>
    %74 = vector.extract_strided_slice %16 {offsets = [0, 24], sizes = [8, 8], strides = [1, 1]} : vector<8x32xbf16> to vector<8x8xbf16>
    %75 = vector.extract_strided_slice %18 {offsets = [0, 24], sizes = [8, 8], strides = [1, 1]} : vector<8x32xbf16> to vector<8x8xbf16>
    %cst_26 = arith.constant dense<0.000000e+00> : vector<8x8xf32>
    %76 = tpu.matmul %73, %74, %cst_26 {dimension_numbers = #tpu.dot_dimension_numbers<[1], [1], [0], [0], [0, 0, 1, 0], [], []>} : vector<8x8xbf16>, vector<8x8xbf16>, vector<8x8xf32> -> vector<8x8xf32>
    %cst_27 = arith.constant dense<0xFF800000> : vector<8xf32>
    %77 = vector.multi_reduction <maximumf>, %76, %cst_27 [1] : vector<8x8xf32> to vector<8xf32>
    %78 = vector.shape_cast %77 : vector<8xf32> to vector<8x1xf32>
    %79 = vector.broadcast %78 : vector<8x1xf32> to vector<8x8xf32>
    %80 = arith.subf %76, %79 : vector<8x8xf32>
    %81 = math.exp %80 : vector<8x8xf32>
    %cst_28 = arith.constant dense<0.000000e+00> : vector<8xf32>
    %82 = vector.multi_reduction <add>, %81, %cst_28 [1] : vector<8x8xf32> to vector<8xf32>
    %83 = vector.shape_cast %82 : vector<8xf32> to vector<8x1xf32>
    %84 = tpu.reciprocal %83 {approx = true} : vector<8x1xf32> -> vector<8x1xf32>
    %85 = arith.truncf %81 : vector<8x8xf32> to vector<8x8xbf16>
    %cst_29 = arith.constant dense<0.000000e+00> : vector<8x8xf32>
    %86 = tpu.matmul %85, %75, %cst_29 {dimension_numbers = #tpu.dot_dimension_numbers<[1], [0], [0], [1], [0, 0, 1, 1], [], []>} : vector<8x8xbf16>, vector<8x8xbf16>, vector<8x8xf32> -> vector<8x8xf32>
    %87 = vector.broadcast %84 : vector<8x1xf32> to vector<8x8xf32>
    %88 = arith.mulf %86, %87 : vector<8x8xf32>
    %89 = arith.truncf %88 : vector<8x8xf32> to vector<8x8xbf16>
    %c0_30 = arith.constant 0 : index
    %c24 = arith.constant 24 : index
    %90 = vector.load %arg12[%c0_30, %c24] : memref<8x32xbf16, #tpu.memory_space<vmem>>, vector<8x8xbf16>
    tpu.vector_store %arg12[%c0_30, %c24], %89 {strides = array<i32>} : memref<8x32xbf16, #tpu.memory_space<vmem>>, vector<8x8xbf16>,
    %c0_31 = arith.constant 0 : index
    %c0_32 = arith.constant 0 : index
    %91 = vector.load %arg12[%c0_31, %c0_32] : memref<8x32xbf16, #tpu.memory_space<vmem>>, vector<8x32xbf16>
    %c0_33 = arith.constant 0 : index
    %c0_34 = arith.constant 0 : index
    %92 = vector.load %arg4[%c0_33, %c0_34] : memref<32x32xbf16, #tpu.memory_space<vmem>>, vector<32x32xbf16>
    %cst_35 = arith.constant dense<0.000000e+00> : vector<8x32xf32>
    %93 = tpu.matmul %91, %92, %cst_35 {dimension_numbers = #tpu.dot_dimension_numbers<[1], [0], [0], [1], [0, 0, 1, 1], [], []>} : vector<8x32xbf16>, vector<32x32xbf16>, vector<8x32xf32> -> vector<8x32xf32>
    %94 = vector.extract_strided_slice %4 {offsets = [1, 0], sizes = [1, 32], strides = [1, 1]} : vector<16x128xf32> to vector<1x32xf32>
    %95 = vector.broadcast %94 : vector<1x32xf32> to vector<8x32xf32>
    %96 = arith.addf %93, %95 : vector<8x32xf32>
    %97 = arith.addf %1, %96 : vector<8x32xf32>
    %98 = vector.extract_strided_slice %4 {offsets = [2, 0], sizes = [1, 32], strides = [1, 1]} : vector<16x128xf32> to vector<1x32xf32>
    %99 = vector.extract_strided_slice %4 {offsets = [3, 0], sizes = [1, 32], strides = [1, 1]} : vector<16x128xf32> to vector<1x32xf32>
    %cst_36 = arith.constant dense<0.000000e+00> : vector<8xf32>
    %100 = vector.multi_reduction <add>, %97, %cst_36 [1] : vector<8x32xf32> to vector<8xf32>
    %101 = vector.shape_cast %100 : vector<8xf32> to vector<8x1xf32>
    %cst_37 = arith.constant 3.200000e+01 : f32
    %102 = vector.broadcast %cst_37 : f32 to vector<8x1xf32>
    %103 = arith.divf %101, %102 : vector<8x1xf32>
    %104 = vector.broadcast %103 : vector<8x1xf32> to vector<8x32xf32>
    %105 = arith.subf %97, %104 : vector<8x32xf32>
    %106 = arith.mulf %105, %105 : vector<8x32xf32>
    %cst_38 = arith.constant dense<0.000000e+00> : vector<8xf32>
    %107 = vector.multi_reduction <add>, %106, %cst_38 [1] : vector<8x32xf32> to vector<8xf32>
    %108 = vector.shape_cast %107 : vector<8xf32> to vector<8x1xf32>
    %cst_39 = arith.constant 3.200000e+01 : f32
    %109 = vector.broadcast %cst_39 : f32 to vector<8x1xf32>
    %110 = arith.divf %108, %109 : vector<8x1xf32>
    %111 = vector.broadcast %103 : vector<8x1xf32> to vector<8x32xf32>
    %112 = arith.subf %97, %111 : vector<8x32xf32>
    %cst_40 = arith.constant 9.99999974E-6 : f32
    %113 = vector.broadcast %cst_40 : f32 to vector<8x1xf32>
    %114 = arith.addf %110, %113 : vector<8x1xf32>
    %115 = math.rsqrt %114 : vector<8x1xf32>
    %116 = vector.broadcast %115 : vector<8x1xf32> to vector<8x32xf32>
    %117 = arith.mulf %112, %116 : vector<8x32xf32>
    %118 = vector.broadcast %98 : vector<1x32xf32> to vector<8x32xf32>
    %119 = arith.mulf %117, %118 : vector<8x32xf32>
    %120 = vector.broadcast %99 : vector<1x32xf32> to vector<8x32xf32>
    %121 = arith.addf %119, %120 : vector<8x32xf32>
    %122 = arith.truncf %121 : vector<8x32xf32> to vector<8x32xbf16>
    %c0_41 = arith.constant 0 : index
    %c0_42 = arith.constant 0 : index
    %123 = vector.load %arg5[%c0_41, %c0_42] : memref<32x32xbf16, #tpu.memory_space<vmem>>, vector<32x32xbf16>
    %cst_43 = arith.constant dense<0.000000e+00> : vector<8x32xf32>
    %124 = tpu.matmul %122, %123, %cst_43 {dimension_numbers = #tpu.dot_dimension_numbers<[1], [0], [0], [1], [0, 0, 1, 1], [], []>} : vector<8x32xbf16>, vector<32x32xbf16>, vector<8x32xf32> -> vector<8x32xf32>
    %125 = vector.extract_strided_slice %4 {offsets = [4, 0], sizes = [1, 32], strides = [1, 1]} : vector<16x128xf32> to vector<1x32xf32>
    %126 = vector.broadcast %125 : vector<1x32xf32> to vector<8x32xf32>
    %127 = arith.addf %124, %126 : vector<8x32xf32>
    %cst_44 = arith.constant 0.353553385 : f32
    %128 = vector.broadcast %cst_44 : f32 to vector<8x32xf32>
    %129 = arith.mulf %127, %128 : vector<8x32xf32>
    %130 = arith.truncf %129 : vector<8x32xf32> to vector<8x32xbf16>
    %131 = arith.truncf %3 : vector<8x32xf32> to vector<8x32xbf16>
    %c0_45 = arith.constant 0 : index
    %c0_46 = arith.constant 0 : index
    %132 = vector.load %arg6[%c0_45, %c0_46] : memref<32x64xbf16, #tpu.memory_space<vmem>>, vector<32x64xbf16>
    %cst_47 = arith.constant dense<0.000000e+00> : vector<8x64xf32>
    %133 = tpu.matmul %131, %132, %cst_47 {dimension_numbers = #tpu.dot_dimension_numbers<[1], [0], [0], [1], [0, 0, 1, 1], [], []>} : vector<8x32xbf16>, vector<32x64xbf16>, vector<8x64xf32> -> vector<8x64xf32>
    %134 = vector.extract_strided_slice %4 {offsets = [5, 0], sizes = [1, 64], strides = [1, 1]} : vector<16x128xf32> to vector<1x64xf32>
    %135 = vector.broadcast %134 : vector<1x64xf32> to vector<8x64xf32>
    %136 = arith.addf %133, %135 : vector<8x64xf32>
    %137 = vector.extract_strided_slice %136 {offsets = [0, 0], sizes = [8, 32], strides = [1, 1]} : vector<8x64xf32> to vector<8x32xf32>
    %138 = arith.truncf %137 : vector<8x32xf32> to vector<8x32xbf16>
    %139 = vector.extract_strided_slice %136 {offsets = [0, 32], sizes = [8, 32], strides = [1, 1]} : vector<8x64xf32> to vector<8x32xf32>
    %140 = arith.truncf %139 : vector<8x32xf32> to vector<8x32xbf16>
    %141 = vector.extract_strided_slice %130 {offsets = [0, 0], sizes = [8, 8], strides = [1, 1]} : vector<8x32xbf16> to vector<8x8xbf16>
    %142 = vector.extract_strided_slice %138 {offsets = [0, 0], sizes = [8, 8], strides = [1, 1]} : vector<8x32xbf16> to vector<8x8xbf16>
    %143 = vector.extract_strided_slice %140 {offsets = [0, 0], sizes = [8, 8], strides = [1, 1]} : vector<8x32xbf16> to vector<8x8xbf16>
    %cst_48 = arith.constant dense<0.000000e+00> : vector<8x8xf32>
    %144 = tpu.matmul %141, %142, %cst_48 {dimension_numbers = #tpu.dot_dimension_numbers<[1], [1], [0], [0], [0, 0, 1, 0], [], []>} : vector<8x8xbf16>, vector<8x8xbf16>, vector<8x8xf32> -> vector<8x8xf32>
    %cst_49 = arith.constant dense<0xFF800000> : vector<8xf32>
    %145 = vector.multi_reduction <maximumf>, %144, %cst_49 [1] : vector<8x8xf32> to vector<8xf32>
    %146 = vector.shape_cast %145 : vector<8xf32> to vector<8x1xf32>
    %147 = vector.broadcast %146 : vector<8x1xf32> to vector<8x8xf32>
    %148 = arith.subf %144, %147 : vector<8x8xf32>
    %149 = math.exp %148 : vector<8x8xf32>
    %cst_50 = arith.constant dense<0.000000e+00> : vector<8xf32>
    %150 = vector.multi_reduction <add>, %149, %cst_50 [1] : vector<8x8xf32> to vector<8xf32>
    %151 = vector.shape_cast %150 : vector<8xf32> to vector<8x1xf32>
    %152 = tpu.reciprocal %151 {approx = true} : vector<8x1xf32> -> vector<8x1xf32>
    %153 = arith.truncf %149 : vector<8x8xf32> to vector<8x8xbf16>
    %cst_51 = arith.constant dense<0.000000e+00> : vector<8x8xf32>
    %154 = tpu.matmul %153, %143, %cst_51 {dimension_numbers = #tpu.dot_dimension_numbers<[1], [0], [0], [1], [0, 0, 1, 1], [], []>} : vector<8x8xbf16>, vector<8x8xbf16>, vector<8x8xf32> -> vector<8x8xf32>
    %155 = vector.broadcast %152 : vector<8x1xf32> to vector<8x8xf32>
    %156 = arith.mulf %154, %155 : vector<8x8xf32>
    %157 = arith.truncf %156 : vector<8x8xf32> to vector<8x8xbf16>
    %c0_52 = arith.constant 0 : index
    %c0_53 = arith.constant 0 : index
    %158 = vector.load %arg12[%c0_52, %c0_53] : memref<8x32xbf16, #tpu.memory_space<vmem>>, vector<8x8xbf16>
    tpu.vector_store %arg12[%c0_52, %c0_53], %157 {strides = array<i32>} : memref<8x32xbf16, #tpu.memory_space<vmem>>, vector<8x8xbf16>,
    %159 = vector.extract_strided_slice %130 {offsets = [0, 8], sizes = [8, 8], strides = [1, 1]} : vector<8x32xbf16> to vector<8x8xbf16>
    %160 = vector.extract_strided_slice %138 {offsets = [0, 8], sizes = [8, 8], strides = [1, 1]} : vector<8x32xbf16> to vector<8x8xbf16>
    %161 = vector.extract_strided_slice %140 {offsets = [0, 8], sizes = [8, 8], strides = [1, 1]} : vector<8x32xbf16> to vector<8x8xbf16>
    %cst_54 = arith.constant dense<0.000000e+00> : vector<8x8xf32>
    %162 = tpu.matmul %159, %160, %cst_54 {dimension_numbers = #tpu.dot_dimension_numbers<[1], [1], [0], [0], [0, 0, 1, 0], [], []>} : vector<8x8xbf16>, vector<8x8xbf16>, vector<8x8xf32> -> vector<8x8xf32>
    %cst_55 = arith.constant dense<0xFF800000> : vector<8xf32>
    %163 = vector.multi_reduction <maximumf>, %162, %cst_55 [1] : vector<8x8xf32> to vector<8xf32>
    %164 = vector.shape_cast %163 : vector<8xf32> to vector<8x1xf32>
    %165 = vector.broadcast %164 : vector<8x1xf32> to vector<8x8xf32>
    %166 = arith.subf %162, %165 : vector<8x8xf32>
    %167 = math.exp %166 : vector<8x8xf32>
    %cst_56 = arith.constant dense<0.000000e+00> : vector<8xf32>
    %168 = vector.multi_reduction <add>, %167, %cst_56 [1] : vector<8x8xf32> to vector<8xf32>
    %169 = vector.shape_cast %168 : vector<8xf32> to vector<8x1xf32>
    %170 = tpu.reciprocal %169 {approx = true} : vector<8x1xf32> -> vector<8x1xf32>
    %171 = arith.truncf %167 : vector<8x8xf32> to vector<8x8xbf16>
    %cst_57 = arith.constant dense<0.000000e+00> : vector<8x8xf32>
    %172 = tpu.matmul %171, %161, %cst_57 {dimension_numbers = #tpu.dot_dimension_numbers<[1], [0], [0], [1], [0, 0, 1, 1], [], []>} : vector<8x8xbf16>, vector<8x8xbf16>, vector<8x8xf32> -> vector<8x8xf32>
    %173 = vector.broadcast %170 : vector<8x1xf32> to vector<8x8xf32>
    %174 = arith.mulf %172, %173 : vector<8x8xf32>
    %175 = arith.truncf %174 : vector<8x8xf32> to vector<8x8xbf16>
    %c0_58 = arith.constant 0 : index
    %c8_59 = arith.constant 8 : index
    %176 = vector.load %arg12[%c0_58, %c8_59] : memref<8x32xbf16, #tpu.memory_space<vmem>>, vector<8x8xbf16>
    tpu.vector_store %arg12[%c0_58, %c8_59], %175 {strides = array<i32>} : memref<8x32xbf16, #tpu.memory_space<vmem>>, vector<8x8xbf16>,
    %177 = vector.extract_strided_slice %130 {offsets = [0, 16], sizes = [8, 8], strides = [1, 1]} : vector<8x32xbf16> to vector<8x8xbf16>
    %178 = vector.extract_strided_slice %138 {offsets = [0, 16], sizes = [8, 8], strides = [1, 1]} : vector<8x32xbf16> to vector<8x8xbf16>
    %179 = vector.extract_strided_slice %140 {offsets = [0, 16], sizes = [8, 8], strides = [1, 1]} : vector<8x32xbf16> to vector<8x8xbf16>
    %cst_60 = arith.constant dense<0.000000e+00> : vector<8x8xf32>
    %180 = tpu.matmul %177, %178, %cst_60 {dimension_numbers = #tpu.dot_dimension_numbers<[1], [1], [0], [0], [0, 0, 1, 0], [], []>} : vector<8x8xbf16>, vector<8x8xbf16>, vector<8x8xf32> -> vector<8x8xf32>
    %cst_61 = arith.constant dense<0xFF800000> : vector<8xf32>
    %181 = vector.multi_reduction <maximumf>, %180, %cst_61 [1] : vector<8x8xf32> to vector<8xf32>
    %182 = vector.shape_cast %181 : vector<8xf32> to vector<8x1xf32>
    %183 = vector.broadcast %182 : vector<8x1xf32> to vector<8x8xf32>
    %184 = arith.subf %180, %183 : vector<8x8xf32>
    %185 = math.exp %184 : vector<8x8xf32>
    %cst_62 = arith.constant dense<0.000000e+00> : vector<8xf32>
    %186 = vector.multi_reduction <add>, %185, %cst_62 [1] : vector<8x8xf32> to vector<8xf32>
    %187 = vector.shape_cast %186 : vector<8xf32> to vector<8x1xf32>
    %188 = tpu.reciprocal %187 {approx = true} : vector<8x1xf32> -> vector<8x1xf32>
    %189 = arith.truncf %185 : vector<8x8xf32> to vector<8x8xbf16>
    %cst_63 = arith.constant dense<0.000000e+00> : vector<8x8xf32>
    %190 = tpu.matmul %189, %179, %cst_63 {dimension_numbers = #tpu.dot_dimension_numbers<[1], [0], [0], [1], [0, 0, 1, 1], [], []>} : vector<8x8xbf16>, vector<8x8xbf16>, vector<8x8xf32> -> vector<8x8xf32>
    %191 = vector.broadcast %188 : vector<8x1xf32> to vector<8x8xf32>
    %192 = arith.mulf %190, %191 : vector<8x8xf32>
    %193 = arith.truncf %192 : vector<8x8xf32> to vector<8x8xbf16>
    %c0_64 = arith.constant 0 : index
    %c16_65 = arith.constant 16 : index
    %194 = vector.load %arg12[%c0_64, %c16_65] : memref<8x32xbf16, #tpu.memory_space<vmem>>, vector<8x8xbf16>
    tpu.vector_store %arg12[%c0_64, %c16_65], %193 {strides = array<i32>} : memref<8x32xbf16, #tpu.memory_space<vmem>>, vector<8x8xbf16>,
    %195 = vector.extract_strided_slice %130 {offsets = [0, 24], sizes = [8, 8], strides = [1, 1]} : vector<8x32xbf16> to vector<8x8xbf16>
    %196 = vector.extract_strided_slice %138 {offsets = [0, 24], sizes = [8, 8], strides = [1, 1]} : vector<8x32xbf16> to vector<8x8xbf16>
    %197 = vector.extract_strided_slice %140 {offsets = [0, 24], sizes = [8, 8], strides = [1, 1]} : vector<8x32xbf16> to vector<8x8xbf16>
    %cst_66 = arith.constant dense<0.000000e+00> : vector<8x8xf32>
    %198 = tpu.matmul %195, %196, %cst_66 {dimension_numbers = #tpu.dot_dimension_numbers<[1], [1], [0], [0], [0, 0, 1, 0], [], []>} : vector<8x8xbf16>, vector<8x8xbf16>, vector<8x8xf32> -> vector<8x8xf32>
    %cst_67 = arith.constant dense<0xFF800000> : vector<8xf32>
    %199 = vector.multi_reduction <maximumf>, %198, %cst_67 [1] : vector<8x8xf32> to vector<8xf32>
    %200 = vector.shape_cast %199 : vector<8xf32> to vector<8x1xf32>
    %201 = vector.broadcast %200 : vector<8x1xf32> to vector<8x8xf32>
    %202 = arith.subf %198, %201 : vector<8x8xf32>
    %203 = math.exp %202 : vector<8x8xf32>
    %cst_68 = arith.constant dense<0.000000e+00> : vector<8xf32>
    %204 = vector.multi_reduction <add>, %203, %cst_68 [1] : vector<8x8xf32> to vector<8xf32>
    %205 = vector.shape_cast %204 : vector<8xf32> to vector<8x1xf32>
    %206 = tpu.reciprocal %205 {approx = true} : vector<8x1xf32> -> vector<8x1xf32>
    %207 = arith.truncf %203 : vector<8x8xf32> to vector<8x8xbf16>
    %cst_69 = arith.constant dense<0.000000e+00> : vector<8x8xf32>
    %208 = tpu.matmul %207, %197, %cst_69 {dimension_numbers = #tpu.dot_dimension_numbers<[1], [0], [0], [1], [0, 0, 1, 1], [], []>} : vector<8x8xbf16>, vector<8x8xbf16>, vector<8x8xf32> -> vector<8x8xf32>
    %209 = vector.broadcast %206 : vector<8x1xf32> to vector<8x8xf32>
    %210 = arith.mulf %208, %209 : vector<8x8xf32>
    %211 = arith.truncf %210 : vector<8x8xf32> to vector<8x8xbf16>
    %c0_70 = arith.constant 0 : index
    %c24_71 = arith.constant 24 : index
    %212 = vector.load %arg12[%c0_70, %c24_71] : memref<8x32xbf16, #tpu.memory_space<vmem>>, vector<8x8xbf16>
    tpu.vector_store %arg12[%c0_70, %c24_71], %211 {strides = array<i32>} : memref<8x32xbf16, #tpu.memory_space<vmem>>, vector<8x8xbf16>,
    %c0_72 = arith.constant 0 : index
    %c0_73 = arith.constant 0 : index
    %213 = vector.load %arg12[%c0_72, %c0_73] : memref<8x32xbf16, #tpu.memory_space<vmem>>, vector<8x32xbf16>
    %c0_74 = arith.constant 0 : index
    %c0_75 = arith.constant 0 : index
    %214 = vector.load %arg7[%c0_74, %c0_75] : memref<32x32xbf16, #tpu.memory_space<vmem>>, vector<32x32xbf16>
    %cst_76 = arith.constant dense<0.000000e+00> : vector<8x32xf32>
    %215 = tpu.matmul %213, %214, %cst_76 {dimension_numbers = #tpu.dot_dimension_numbers<[1], [0], [0], [1], [0, 0, 1, 1], [], []>} : vector<8x32xbf16>, vector<32x32xbf16>, vector<8x32xf32> -> vector<8x32xf32>
    %216 = vector.extract_strided_slice %4 {offsets = [6, 0], sizes = [1, 32], strides = [1, 1]} : vector<16x128xf32> to vector<1x32xf32>
    %217 = vector.broadcast %216 : vector<1x32xf32> to vector<8x32xf32>
    %218 = arith.addf %215, %217 : vector<8x32xf32>
    %219 = arith.addf %121, %218 : vector<8x32xf32>
    %220 = vector.extract_strided_slice %4 {offsets = [7, 0], sizes = [1, 32], strides = [1, 1]} : vector<16x128xf32> to vector<1x32xf32>
    %221 = vector.extract_strided_slice %4 {offsets = [8, 0], sizes = [1, 32], strides = [1, 1]} : vector<16x128xf32> to vector<1x32xf32>
    %cst_77 = arith.constant dense<0.000000e+00> : vector<8xf32>
    %222 = vector.multi_reduction <add>, %219, %cst_77 [1] : vector<8x32xf32> to vector<8xf32>
    %223 = vector.shape_cast %222 : vector<8xf32> to vector<8x1xf32>
    %cst_78 = arith.constant 3.200000e+01 : f32
    %224 = vector.broadcast %cst_78 : f32 to vector<8x1xf32>
    %225 = arith.divf %223, %224 : vector<8x1xf32>
    %226 = vector.broadcast %225 : vector<8x1xf32> to vector<8x32xf32>
    %227 = arith.subf %219, %226 : vector<8x32xf32>
    %228 = arith.mulf %227, %227 : vector<8x32xf32>
    %cst_79 = arith.constant dense<0.000000e+00> : vector<8xf32>
    %229 = vector.multi_reduction <add>, %228, %cst_79 [1] : vector<8x32xf32> to vector<8xf32>
    %230 = vector.shape_cast %229 : vector<8xf32> to vector<8x1xf32>
    %cst_80 = arith.constant 3.200000e+01 : f32
    %231 = vector.broadcast %cst_80 : f32 to vector<8x1xf32>
    %232 = arith.divf %230, %231 : vector<8x1xf32>
    %233 = vector.broadcast %225 : vector<8x1xf32> to vector<8x32xf32>
    %234 = arith.subf %219, %233 : vector<8x32xf32>
    %cst_81 = arith.constant 9.99999974E-6 : f32
    %235 = vector.broadcast %cst_81 : f32 to vector<8x1xf32>
    %236 = arith.addf %232, %235 : vector<8x1xf32>
    %237 = math.rsqrt %236 : vector<8x1xf32>
    %238 = vector.broadcast %237 : vector<8x1xf32> to vector<8x32xf32>
    %239 = arith.mulf %234, %238 : vector<8x32xf32>
    %240 = vector.broadcast %220 : vector<1x32xf32> to vector<8x32xf32>
    %241 = arith.mulf %239, %240 : vector<8x32xf32>
    %242 = vector.broadcast %221 : vector<1x32xf32> to vector<8x32xf32>
    %243 = arith.addf %241, %242 : vector<8x32xf32>
    %244 = arith.truncf %243 : vector<8x32xf32> to vector<8x32xbf16>
    %c0_82 = arith.constant 0 : index
    %c0_83 = arith.constant 0 : index
    %245 = vector.load %arg8[%c0_82, %c0_83] : memref<32x128xbf16, #tpu.memory_space<vmem>>, vector<32x128xbf16>
    %cst_84 = arith.constant dense<0.000000e+00> : vector<8x128xf32>
    %246 = tpu.matmul %244, %245, %cst_84 {dimension_numbers = #tpu.dot_dimension_numbers<[1], [0], [0], [1], [0, 0, 1, 1], [], []>} : vector<8x32xbf16>, vector<32x128xbf16>, vector<8x128xf32> -> vector<8x128xf32>
    %247 = vector.extract_strided_slice %4 {offsets = [9, 0], sizes = [1, 128], strides = [1, 1]} : vector<16x128xf32> to vector<1x128xf32>
    %248 = vector.broadcast %247 : vector<1x128xf32> to vector<8x128xf32>
    %249 = arith.addf %246, %248 : vector<8x128xf32>
    %cst_85 = arith.constant 0.000000e+00 : f32
    %250 = vector.broadcast %cst_85 : f32 to vector<8x128xf32>
    %251 = arith.maximumf %249, %250 : vector<8x128xf32>
    %252 = arith.truncf %251 : vector<8x128xf32> to vector<8x128xbf16>
    %c0_86 = arith.constant 0 : index
    %c0_87 = arith.constant 0 : index
    %253 = vector.load %arg9[%c0_86, %c0_87] : memref<128x32xbf16, #tpu.memory_space<vmem>>, vector<128x32xbf16>
    %cst_88 = arith.constant dense<0.000000e+00> : vector<8x32xf32>
    %254 = tpu.matmul %252, %253, %cst_88 {dimension_numbers = #tpu.dot_dimension_numbers<[1], [0], [0], [1], [0, 0, 1, 1], [], []>} : vector<8x128xbf16>, vector<128x32xbf16>, vector<8x32xf32> -> vector<8x32xf32>
    %255 = vector.extract_strided_slice %4 {offsets = [10, 0], sizes = [1, 32], strides = [1, 1]} : vector<16x128xf32> to vector<1x32xf32>
    %256 = vector.broadcast %255 : vector<1x32xf32> to vector<8x32xf32>
    %257 = arith.addf %254, %256 : vector<8x32xf32>
    %258 = arith.addf %243, %257 : vector<8x32xf32>
    %259 = vector.extract_strided_slice %4 {offsets = [11, 0], sizes = [1, 32], strides = [1, 1]} : vector<16x128xf32> to vector<1x32xf32>
    %260 = vector.extract_strided_slice %4 {offsets = [12, 0], sizes = [1, 32], strides = [1, 1]} : vector<16x128xf32> to vector<1x32xf32>
    %cst_89 = arith.constant dense<0.000000e+00> : vector<8xf32>
    %261 = vector.multi_reduction <add>, %258, %cst_89 [1] : vector<8x32xf32> to vector<8xf32>
    %262 = vector.shape_cast %261 : vector<8xf32> to vector<8x1xf32>
    %cst_90 = arith.constant 3.200000e+01 : f32
    %263 = vector.broadcast %cst_90 : f32 to vector<8x1xf32>
    %264 = arith.divf %262, %263 : vector<8x1xf32>
    %265 = vector.broadcast %264 : vector<8x1xf32> to vector<8x32xf32>
    %266 = arith.subf %258, %265 : vector<8x32xf32>
    %267 = arith.mulf %266, %266 : vector<8x32xf32>
    %cst_91 = arith.constant dense<0.000000e+00> : vector<8xf32>
    %268 = vector.multi_reduction <add>, %267, %cst_91 [1] : vector<8x32xf32> to vector<8xf32>
    %269 = vector.shape_cast %268 : vector<8xf32> to vector<8x1xf32>
    %cst_92 = arith.constant 3.200000e+01 : f32
    %270 = vector.broadcast %cst_92 : f32 to vector<8x1xf32>
    %271 = arith.divf %269, %270 : vector<8x1xf32>
    %272 = vector.broadcast %264 : vector<8x1xf32> to vector<8x32xf32>
    %273 = arith.subf %258, %272 : vector<8x32xf32>
    %cst_93 = arith.constant 9.99999974E-6 : f32
    %274 = vector.broadcast %cst_93 : f32 to vector<8x1xf32>
    %275 = arith.addf %271, %274 : vector<8x1xf32>
    %276 = math.rsqrt %275 : vector<8x1xf32>
    %277 = vector.broadcast %276 : vector<8x1xf32> to vector<8x32xf32>
    %278 = arith.mulf %273, %277 : vector<8x32xf32>
    %279 = vector.broadcast %259 : vector<1x32xf32> to vector<8x32xf32>
    %280 = arith.mulf %278, %279 : vector<8x32xf32>
    %281 = vector.broadcast %260 : vector<1x32xf32> to vector<8x32xf32>
    %282 = arith.addf %280, %281 : vector<8x32xf32>
    %c0_94 = arith.constant 0 : index
    %c0_95 = arith.constant 0 : index
    %c0_96 = arith.constant 0 : index
    %283 = vector.load %arg11[%c0_94, %c0_95, %c0_96] : memref<1x8x32xf32, #tpu.memory_space<vmem>>, vector<1x8x32xf32>
    %284 = vector.shape_cast %283 : vector<1x8x32xf32> to vector<8x32xf32>
    %285 = vector.shape_cast %282 : vector<8x32xf32> to vector<1x8x32xf32>
    tpu.vector_store %arg11[%c0_94, %c0_95, %c0_96], %285 {strides = array<i32>} : memref<1x8x32xf32, #tpu.memory_space<vmem>>, vector<1x8x32xf32>,
    return
  }
  func.func @transform_0(%arg0: i32) -> (i32, i32, i32) {
    %c0_i32 = arith.constant 0 : i32
    %c0_i32_0 = arith.constant 0 : i32
    %c0_i32_1 = arith.constant 0 : i32
    return %arg0, %c0_i32, %c0_i32_0 : i32, i32, i32
  }
  func.func @transform_1(%arg0: i32) -> (i32, i32, i32) {
    %c0_i32 = arith.constant 0 : i32
    %c0_i32_0 = arith.constant 0 : i32
    %c0_i32_1 = arith.constant 0 : i32
    return %arg0, %c0_i32, %c0_i32_0 : i32, i32, i32
  }
  func.func @transform_2(%arg0: i32) -> (i32, i32) {
    %c0_i32 = arith.constant 0 : i32
    %c0_i32_0 = arith.constant 0 : i32
    %c0_i32_1 = arith.constant 0 : i32
    return %c0_i32, %c0_i32_0 : i32, i32
  }
  func.func @transform_3(%arg0: i32) -> (i32, i32) {
    %c0_i32 = arith.constant 0 : i32
    %c0_i32_0 = arith.constant 0 : i32
    %c0_i32_1 = arith.constant 0 : i32
    return %c0_i32, %c0_i32_0 : i32, i32
  }
  func.func @transform_4(%arg0: i32) -> (i32, i32) {
    %c0_i32 = arith.constant 0 : i32
    %c0_i32_0 = arith.constant 0 : i32
    %c0_i32_1 = arith.constant 0 : i32
    return %c0_i32, %c0_i32_0 : i32, i32
  }
  func.func @transform_5(%arg0: i32) -> (i32, i32) {
    %c0_i32 = arith.constant 0 : i32
    %c0_i32_0 = arith.constant 0 : i32
    %c0_i32_1 = arith.constant 0 : i32
    return %c0_i32, %c0_i32_0 : i32, i32
  }
  func.func @transform_6(%arg0: i32) -> (i32, i32) {
    %c0_i32 = arith.constant 0 : i32
    %c0_i32_0 = arith.constant 0 : i32
    %c0_i32_1 = arith.constant 0 : i32
    return %c0_i32, %c0_i32_0 : i32, i32
  }
  func.func @transform_7(%arg0: i32) -> (i32, i32) {
    %c0_i32 = arith.constant 0 : i32
    %c0_i32_0 = arith.constant 0 : i32
    %c0_i32_1 = arith.constant 0 : i32
    return %c0_i32, %c0_i32_0 : i32, i32
  }
  func.func @transform_8(%arg0: i32) -> (i32, i32) {
    %c0_i32 = arith.constant 0 : i32
    %c0_i32_0 = arith.constant 0 : i32
    %c0_i32_1 = arith.constant 0 : i32
    return %c0_i32, %c0_i32_0 : i32, i32
  }
  func.func @transform_9(%arg0: i32) -> (i32, i32) {
    %c0_i32 = arith.constant 0 : i32
    %c0_i32_0 = arith.constant 0 : i32
    %c0_i32_1 = arith.constant 0 : i32
    return %c0_i32, %c0_i32_0 : i32, i32
  }
  func.func @transform_10(%arg0: i32) -> (i32, i32, i32) {
    %c0_i32 = arith.constant 0 : i32
    %c0_i32_0 = arith.constant 0 : i32
    %c0_i32_1 = arith.constant 0 : i32
    return %arg0, %c0_i32, %c0_i32_0 : i32, i32, i32
  }
}

</mosaic_0001>

<llo_original>
// kernel: tpu_custom_call.1
$region0: #{tpu_custom_call.1}
  #allocation0 [shape = 'u32[]', space=smem, size = 0x4, offset = 0x4, fixed_abs, tag = 'smem constant byte address 0x4 - core index']
  #allocation1 [shape = 'u32[144,128]{1,0:T(1,128)}', space=vmem, size = 0x12000, scoped, tag = 'internal scratch']
  #allocation2 [shape = 'bf16[8,32]{1,0:T(8,128)(2,1)}', space=vmem, size = 0x800, scoped, tag = 'scratch operand']
  %s0 = inlined_call_operand.vmem [shape: f32[2,8,32], index: 0, kind: input, shape index: {}]
  %s1 = inlined_call_operand.vmem [shape: f32[2,8,32], index: 1, kind: input, shape index: {}]
  %s2 = inlined_call_operand.vmem [shape: bf16[32,96], index: 2, kind: input, shape index: {}]
  %s3 = inlined_call_operand.vmem [shape: bf16[32,32], index: 3, kind: input, shape index: {}]
  %s4 = inlined_call_operand.vmem [shape: bf16[32,32], index: 4, kind: input, shape index: {}]
  %s5 = inlined_call_operand.vmem [shape: bf16[32,64], index: 5, kind: input, shape index: {}]
  %s6 = inlined_call_operand.hbm [shape: bf16[32,32], index: 6, kind: input, shape index: {}]
  %s7 = inlined_call_operand.hbm [shape: bf16[32,128], index: 7, kind: input, shape index: {}]
  %s8 = inlined_call_operand.vmem [shape: bf16[128,32], index: 8, kind: input, shape index: {}]
  %s9 = inlined_call_operand.vmem [shape: f32[16,128], index: 9, kind: input, shape index: {}]
  %s10 = inlined_call_operand.hbm [shape: f32[2,8,32], index: 10, kind: output, shape index: {}]
  %s11 = sld [smem:[#allocation0]]
  $region81: #{tpu_custom_call.1} parent=0
    _
  %s13 = ssub.s32 1, %s11
  %s14 = scalar_select 0, %s13, %s11
  $region1: #{tpu_custom_call.1} parent=0
    #allocation3 [shape = 'u8[8192]{0}', space=vmem, size = 0x2000, scoped, tag = 'input window, operand 6, single buffered']
    #allocation4 [shape = 's32[2]{0}', space=sflag, size = 0x8, scoped, tag = 'scoped memory for tpu_custom_call.1']
    #allocation5 [shape = 's32[2]{0}', space=sflag, size = 0x8, scoped, tag = 'scoped memory for tpu_custom_call.1']
    #allocation6 [shape = 'u8[8192]{0}', space=vmem, size = 0x2000, scoped, tag = 'input window, operand 7, single buffered']
    #allocation7 [shape = 's32[1]{0}', space=sflag, size = 0x4, scoped, tag = 'scoped memory for tpu_custom_call.1']
    #allocation8 [shape = 'u8[8192]{0}', space=vmem, size = 0x2000, scoped, tag = 'output window, operand 0']
    %15 = vsyncpa [#allocation4], 0
    %16 = vsyncpa [#allocation7], 0
    %17 = vsyncpa [#allocation5], 0
    %s18 = scalar_lea.sflag [#allocation5], 1
    %19 = vsyncpa %s18, 0
    loop: start=0, step=1, limit=4
    $region2: #{tpu_custom_call.1} parent=1 // loop_pre_header
      _
    $region3: #{tpu_custom_call.1} parent=1 // loop_header
      %s21 = sphi 0, %s25
      %p22 = scmp.ge.s32.totalorder %s21, 4
      %s31 = sphi 0, %s33
      %s34 = sphi 0, %s31
      %s35 = sphi 0, %s34
      %s51 = sphi 0, %s35
      %s57 = sphi 0, %s59
      %s60 = sphi 0, %s57
      %s61 = sphi 0, %s60
      %s77 = sphi 0, %s61
      %s81 = sphi 0, %s81
      %s83 = sphi 0, %s81
      %s84 = sphi 0, %s83
      %s98 = sphi 0, %s84
      %s102 = sphi 0, %s102
      %s104 = sphi 0, %s102
      %s105 = sphi 0, %s104
      %s119 = sphi 0, %s105
      %s123 = sphi 0, %s123
      %s125 = sphi 0, %s123
      %s126 = sphi 0, %s125
      %s140 = sphi 0, %s126
      %s144 = sphi 0, %s144
      %s146 = sphi 0, %s144
      %s147 = sphi 0, %s146
      %s161 = sphi 0, %s147
      %s165 = sphi 0, %s165
      %s167 = sphi 0, %s165
      %s168 = sphi 0, %s167
      %s182 = sphi 0, %s168
      %s186 = sphi 0, %s186
      %s188 = sphi 0, %s186
      %s189 = sphi 0, %s188
      %s203 = sphi 0, %s189
      %s207 = sphi 0, %s207
      %s209 = sphi 0, %s207
      %s210 = sphi 0, %s209
      %s224 = sphi 0, %s210
      %s228 = sphi 0, %s228
      %s230 = sphi 0, %s228
      %s231 = sphi 0, %s230
      %s245 = sphi 0, %s231
      %s251 = sphi 0, %s253
      %s254 = sphi 0, %s251
      %s255 = sphi 0, %s254
      %s271 = sphi 0, %s255
    $region4: #{tpu_custom_call.1} parent=1 // loop_header_branch
      %24 = sbr.rel (%p22) target = $region8
    $region5: #{tpu_custom_call.1} parent=1 // loop_body
      %s26 = ssub.s32 %s21, 1
      %s27 = ssub.s32 %s21, 2
      %s28 = sadd.s32 %s21, 1
      %s29 = ssub.s32 %s21, %s28
      %p30 = scmp.eq.s32.totalorder %s29, 0
      %s32 = sadd.s32 %s31, 1
      %s33 = scalar_select %p30, %s31, %s32
      %p36 = pneg %p30
      %p37 = scmp.eq.s32.totalorder %s21, 1
      %p38 = por %p36, %p37
      %p39 = scmp.ne.s32.totalorder %s31, %s34
      %p40 = scmp.eq.s32.totalorder %s21, 0
      %p41 = por %p39, %p40
      %p42 = scmp.ne.s32.totalorder %s31, %s34
      %p43 = scmp.eq.s32.totalorder %s26, 1
      %p44 = por %p42, %p43
      %p45 = scmp.ne.s32.totalorder %s34, %s35
      %p46 = scmp.eq.s32.totalorder %s26, 0
      %p47 = por %p45, %p46
      %p48 = scmp.ne.s32.totalorder %s34, %s35
      %p49 = scmp.eq.s32.totalorder %s27, 1
      %p50 = por %p48, %p49
      %p52 = scmp.ne.s32.totalorder %s35, %s51
      %p53 = scmp.eq.s32.totalorder %s27, 0
      %p54 = por %p52, %p53
      %s55 = ssub.s32 %s21, %s28
      %p56 = scmp.eq.s32.totalorder %s55, 0
      %s58 = sadd.s32 %s57, 1
      %s59 = scalar_select %p56, %s57, %s58
      %p62 = pneg %p56
      %p63 = scmp.eq.s32.totalorder %s21, 1
      %p64 = por %p62, %p63
      %p65 = scmp.ne.s32.totalorder %s57, %s60
      %p66 = scmp.eq.s32.totalorder %s21, 0
      %p67 = por %p65, %p66
      %p68 = scmp.ne.s32.totalorder %s57, %s60
      %p69 = scmp.eq.s32.totalorder %s26, 1
      %p70 = por %p68, %p69
      %p71 = scmp.ne.s32.totalorder %s60, %s61
      %p72 = scmp.eq.s32.totalorder %s26, 0
      %p73 = por %p71, %p72
      %p74 = scmp.ne.s32.totalorder %s60, %s61
      %p75 = scmp.eq.s32.totalorder %s27, 1
      %p76 = por %p74, %p75
      %p78 = scmp.ne.s32.totalorder %s61, %s77
      %p79 = scmp.eq.s32.totalorder %s27, 0
      %p80 = por %p78, %p79
      %s82 = sadd.s32 %s81, 1
      %p85 = scmp.eq.s32.totalorder %s21, 1
      %p86 = scmp.ne.s32.totalorder %s81, %s83
      %p87 = scmp.eq.s32.totalorder %s21, 0
      %p88 = por %p86, %p87
      %p89 = scmp.ne.s32.totalorder %s81, %s83
      %p90 = scmp.eq.s32.totalorder %s26, 1
      %p91 = por %p89, %p90
      %p92 = scmp.ne.s32.totalorder %s83, %s84
      %p93 = scmp.eq.s32.totalorder %s26, 0
      %p94 = por %p92, %p93
      %p95 = scmp.ne.s32.totalorder %s83, %s84
      %p96 = scmp.eq.s32.totalorder %s27, 1
      %p97 = por %p95, %p96
      %p99 = scmp.ne.s32.totalorder %s84, %s98
      %p100 = scmp.eq.s32.totalorder %s27, 0
      %p101 = por %p99, %p100
      %s103 = sadd.s32 %s102, 1
      %p106 = scmp.eq.s32.totalorder %s21, 1
      %p107 = scmp.ne.s32.totalorder %s102, %s104
      %p108 = scmp.eq.s32.totalorder %s21, 0
      %p109 = por %p107, %p108
      %p110 = scmp.ne.s32.totalorder %s102, %s104
      %p111 = scmp.eq.s32.totalorder %s26, 1
      %p112 = por %p110, %p111
      %p113 = scmp.ne.s32.totalorder %s104, %s105
      %p114 = scmp.eq.s32.totalorder %s26, 0
      %p115 = por %p113, %p114
      %p116 = scmp.ne.s32.totalorder %s104, %s105
      %p117 = scmp.eq.s32.totalorder %s27, 1
      %p118 = por %p116, %p117
      %p120 = scmp.ne.s32.totalorder %s105, %s119
      %p121 = scmp.eq.s32.totalorder %s27, 0
      %p122 = por %p120, %p121
      %s124 = sadd.s32 %s123, 1
      %p127 = scmp.eq.s32.totalorder %s21, 1
      %p128 = scmp.ne.s32.totalorder %s123, %s125
      %p129 = scmp.eq.s32.totalorder %s21, 0
      %p130 = por %p128, %p129
      %p131 = scmp.ne.s32.totalorder %s123, %s125
      %p132 = scmp.eq.s32.totalorder %s26, 1
      %p133 = por %p131, %p132
      %p134 = scmp.ne.s32.totalorder %s125, %s126
      %p135 = scmp.eq.s32.totalorder %s26, 0
      %p136 = por %p134, %p135
      %p137 = scmp.ne.s32.totalorder %s125, %s126
      %p138 = scmp.eq.s32.totalorder %s27, 1
      %p139 = por %p137, %p138
      %p141 = scmp.ne.s32.totalorder %s126, %s140
      %p142 = scmp.eq.s32.totalorder %s27, 0
      %p143 = por %p141, %p142
      %s145 = sadd.s32 %s144, 1
      %p148 = scmp.eq.s32.totalorder %s21, 1
      %p149 = scmp.ne.s32.totalorder %s144, %s146
      %p150 = scmp.eq.s32.totalorder %s21, 0
      %p151 = por %p149, %p150
      %p152 = scmp.ne.s32.totalorder %s144, %s146
      %p153 = scmp.eq.s32.totalorder %s26, 1
      %p154 = por %p152, %p153
      %p155 = scmp.ne.s32.totalorder %s146, %s147
      %p156 = scmp.eq.s32.totalorder %s26, 0
      %p157 = por %p155, %p156
      %p158 = scmp.ne.s32.totalorder %s146, %s147
      %p159 = scmp.eq.s32.totalorder %s27, 1
      %p160 = por %p158, %p159
      %p162 = scmp.ne.s32.totalorder %s147, %s161
      %p163 = scmp.eq.s32.totalorder %s27, 0
      %p164 = por %p162, %p163
      %s166 = sadd.s32 %s165, 1
      %p169 = scmp.eq.s32.totalorder %s21, 1
      %p170 = scmp.ne.s32.totalorder %s165, %s167
      %p171 = scmp.eq.s32.totalorder %s21, 0
      %p172 = por %p170, %p171
      %p173 = scmp.ne.s32.totalorder %s165, %s167
      %p174 = scmp.eq.s32.totalorder %s26, 1
      %p175 = por %p173, %p174
      %p176 = scmp.ne.s32.totalorder %s167, %s168
      %p177 = scmp.eq.s32.totalorder %s26, 0
      %p178 = por %p176, %p177
      %p179 = scmp.ne.s32.totalorder %s167, %s168
      %p180 = scmp.eq.s32.totalorder %s27, 1
      %p181 = por %p179, %p180
      %p183 = scmp.ne.s32.totalorder %s168, %s182
      %p184 = scmp.eq.s32.totalorder %s27, 0
      %p185 = por %p183, %p184
      %s187 = sadd.s32 %s186, 1
      %p190 = scmp.eq.s32.totalorder %s21, 1
      %p191 = scmp.ne.s32.totalorder %s186, %s188
      %p192 = scmp.eq.s32.totalorder %s21, 0
      %p193 = por %p191, %p192
      %p194 = scmp.ne.s32.totalorder %s186, %s188
      %p195 = scmp.eq.s32.totalorder %s26, 1
      %p196 = por %p194, %p195
      %p197 = scmp.ne.s32.totalorder %s188, %s189
      %p198 = scmp.eq.s32.totalorder %s26, 0
      %p199 = por %p197, %p198
      %p200 = scmp.ne.s32.totalorder %s188, %s189
      %p201 = scmp.eq.s32.totalorder %s27, 1
      %p202 = por %p200, %p201
      %p204 = scmp.ne.s32.totalorder %s189, %s203
      %p205 = scmp.eq.s32.totalorder %s27, 0
      %p206 = por %p204, %p205
      %s208 = sadd.s32 %s207, 1
      %p211 = scmp.eq.s32.totalorder %s21, 1
      %p212 = scmp.ne.s32.totalorder %s207, %s209
      %p213 = scmp.eq.s32.totalorder %s21, 0
      %p214 = por %p212, %p213
      %p215 = scmp.ne.s32.totalorder %s207, %s209
      %p216 = scmp.eq.s32.totalorder %s26, 1
      %p217 = por %p215, %p216
      %p218 = scmp.ne.s32.totalorder %s209, %s210
      %p219 = scmp.eq.s32.totalorder %s26, 0
      %p220 = por %p218, %p219
      %p221 = scmp.ne.s32.totalorder %s209, %s210
      %p222 = scmp.eq.s32.totalorder %s27, 1
      %p223 = por %p221, %p222
      %p225 = scmp.ne.s32.totalorder %s210, %s224
      %p226 = scmp.eq.s32.totalorder %s27, 0
      %p227 = por %p225, %p226
      %s229 = sadd.s32 %s228, 1
      %p232 = scmp.eq.s32.totalorder %s21, 1
      %p233 = scmp.ne.s32.totalorder %s228, %s230
      %p234 = scmp.eq.s32.totalorder %s21, 0
      %p235 = por %p233, %p234
      %p236 = scmp.ne.s32.totalorder %s228, %s230
      %p237 = scmp.eq.s32.totalorder %s26, 1
      %p238 = por %p236, %p237
      %p239 = scmp.ne.s32.totalorder %s230, %s231
      %p240 = scmp.eq.s32.totalorder %s26, 0
      %p241 = por %p239, %p240
      %p242 = scmp.ne.s32.totalorder %s230, %s231
      %p243 = scmp.eq.s32.totalorder %s27, 1
      %p244 = por %p242, %p243
      %p246 = scmp.ne.s32.totalorder %s231, %s245
      %p247 = scmp.eq.s32.totalorder %s27, 0
      %p248 = por %p246, %p247
      %s249 = ssub.s32 %s21, %s28
      %p250 = scmp.eq.s32.totalorder %s249, 0
      %s252 = sadd.s32 %s251, 1
      %s253 = scalar_select %p250, %s251, %s252
      %p256 = pneg %p250
      %p257 = scmp.eq.s32.totalorder %s21, 1
      %p258 = por %p256, %p257
      %p259 = scmp.ne.s32.totalorder %s251, %s254
      %p260 = scmp.eq.s32.totalorder %s21, 0
      %p261 = por %p259, %p260
      %p262 = scmp.ne.s32.totalorder %s251, %s254
      %p263 = scmp.eq.s32.totalorder %s26, 1
      %p264 = por %p262, %p263
      %p265 = scmp.ne.s32.totalorder %s254, %s255
      %p266 = scmp.eq.s32.totalorder %s26, 0
      %p267 = por %p265, %p266
      %p268 = scmp.ne.s32.totalorder %s254, %s255
      %p269 = scmp.eq.s32.totalorder %s27, 1
      %p270 = por %p268, %p269
      %p272 = scmp.ne.s32.totalorder %s255, %s271
      %p273 = scmp.eq.s32.totalorder %s27, 0
      %p274 = por %p272, %p273
      %p275 = scmp.le.s32.totalorder 1, %s21
      %p276 = scmp.lt.s32.totalorder %s21, 3
      %p277 = pnand %p275, %p276
      %p278 = pneg %p277
      // Predicated region
      $region9: #{tpu_custom_call.1} parent=5 // pred_check
        _
      $region10: #{tpu_custom_call.1} parent=5 // pred_check_branch
        %280 = sbr.rel (%p277) target = $region12
      $region11: #{tpu_custom_call.1} parent=5 // pred_region
        %s281 = ssub.s32 %s21, 1
        // Predicated region
        $region13: #{tpu_custom_call.1} parent=11 // pred_check
          %p282 = pneg %p94
        $region14: #{tpu_custom_call.1} parent=11 // pred_check_branch
          %284 = sbr.rel (%p282) target = $region16
        $region15: #{tpu_custom_call.1} parent=11 // pred_region
          _
        $region16: #{tpu_custom_call.1} parent=11 // pred_fallthru
          _
        // Predicated region
        $region17: #{tpu_custom_call.1} parent=11 // pred_check
          %p285 = pneg %p115
        $region18: #{tpu_custom_call.1} parent=11 // pred_check_branch
          %287 = sbr.rel (%p285) target = $region20
        $region19: #{tpu_custom_call.1} parent=11 // pred_region
          _
        $region20: #{tpu_custom_call.1} parent=11 // pred_fallthru
          _
        // Predicated region
        $region21: #{tpu_custom_call.1} parent=11 // pred_check
          %p288 = pneg %p136
        $region22: #{tpu_custom_call.1} parent=11 // pred_check_branch
          %290 = sbr.rel (%p288) target = $region24
        $region23: #{tpu_custom_call.1} parent=11 // pred_region
          _
        $region24: #{tpu_custom_call.1} parent=11 // pred_fallthru
          _
        // Predicated region
        $region25: #{tpu_custom_call.1} parent=11 // pred_check
          %p291 = pneg %p157
        $region26: #{tpu_custom_call.1} parent=11 // pred_check_branch
          %293 = sbr.rel (%p291) target = $region28
        $region27: #{tpu_custom_call.1} parent=11 // pred_region
          _
        $region28: #{tpu_custom_call.1} parent=11 // pred_fallthru
          _
        // Predicated region
        $region29: #{tpu_custom_call.1} parent=11 // pred_check
          %p294 = pneg %p178
        $region30: #{tpu_custom_call.1} parent=11 // pred_check_branch
          %296 = sbr.rel (%p294) target = $region32
        $region31: #{tpu_custom_call.1} parent=11 // pred_region
          %s298 = ssub.s32 256, 256
          %299 = vsyncadd [#allocation4], %s298
          %s300 = sshll.u32 [#allocation3], 4
          %s301 = int_to_ptr.vmem [resolvable:$true] %s300
          %306 = dma.hbm_to_vmem [thread:$0]  %s6, 256, %s301, [#allocation4], 64, 64, 4
        $region32: #{tpu_custom_call.1} parent=11 // pred_fallthru
          _
        // Predicated region
        $region33: #{tpu_custom_call.1} parent=11 // pred_check
          %p307 = pneg %p199
        $region34: #{tpu_custom_call.1} parent=11 // pred_check_branch
          %309 = sbr.rel (%p307) target = $region36
        $region35: #{tpu_custom_call.1} parent=11 // pred_region
          %s311 = ssub.s32 256, 256
          %312 = vsyncadd [#allocation7], %s311
          %s313 = sshll.u32 [#allocation6], 4
          %s314 = int_to_ptr.vmem [resolvable:$true] %s313
          %319 = dma.hbm_to_vmem [thread:$0]  %s7, 256, %s314, [#allocation7], 64, 64, 4
        $region36: #{tpu_custom_call.1} parent=11 // pred_fallthru
          _
        // Predicated region
        $region37: #{tpu_custom_call.1} parent=11 // pred_check
          %p320 = pneg %p220
        $region38: #{tpu_custom_call.1} parent=11 // pred_check_branch
          %322 = sbr.rel (%p320) target = $region40
        $region39: #{tpu_custom_call.1} parent=11 // pred_region
          _
        $region40: #{tpu_custom_call.1} parent=11 // pred_fallthru
          _
        // Predicated region
        $region41: #{tpu_custom_call.1} parent=11 // pred_check
          %p323 = pneg %p241
        $region42: #{tpu_custom_call.1} parent=11 // pred_check_branch
          %325 = sbr.rel (%p323) target = $region44
        $region43: #{tpu_custom_call.1} parent=11 // pred_region
          _
        $region44: #{tpu_custom_call.1} parent=11 // pred_fallthru
          _
      $region12: #{tpu_custom_call.1} parent=5 // pred_fallthru
        _
      %p326 = scmp.lt.s32.totalorder %s21, 2
      // Predicated region
      $region45: #{tpu_custom_call.1} parent=5 // pred_check
        %p327 = pneg %p326
      $region46: #{tpu_custom_call.1} parent=5 // pred_check_branch
        %329 = sbr.rel (%p327) target = $region48
      $region47: #{tpu_custom_call.1} parent=5 // pred_region
        // Predicated region
        $region49: #{tpu_custom_call.1} parent=47 // pred_check
          %p330 = pneg %p41
        $region50: #{tpu_custom_call.1} parent=47 // pred_check_branch
          %332 = sbr.rel (%p330) target = $region52
        $region51: #{tpu_custom_call.1} parent=47 // pred_region
          %p333 = scmp.lt.s32.totalorder %s21, 1
          %s334 = scalar_select %p333, %s21, 1
          %s335 = smul.addr %s334, 8
          %s336 = scalar_lea.vmem %s0, %s335
        $region52: #{tpu_custom_call.1} parent=47 // pred_fallthru
          _
        // Predicated region
        $region53: #{tpu_custom_call.1} parent=47 // pred_check
          %p337 = pneg %p67
        $region54: #{tpu_custom_call.1} parent=47 // pred_check_branch
          %339 = sbr.rel (%p337) target = $region56
        $region55: #{tpu_custom_call.1} parent=47 // pred_region
          %p340 = scmp.lt.s32.totalorder %s21, 1
          %s341 = scalar_select %p340, %s21, 1
          %s342 = smul.addr %s341, 8
          %s343 = scalar_lea.vmem %s1, %s342
        $region56: #{tpu_custom_call.1} parent=47 // pred_fallthru
          _
      $region48: #{tpu_custom_call.1} parent=5 // pred_fallthru
        _
      %p344 = scmp.le.s32.totalorder 1, %s21
      %p345 = scmp.lt.s32.totalorder %s21, 3
      %p346 = pnand %p344, %p345
      %p347 = pneg %p346
      // Predicated region
      $region57: #{tpu_custom_call.1} parent=5 // pred_check
        _
      $region58: #{tpu_custom_call.1} parent=5 // pred_check_branch
        %349 = sbr.rel (%p346) target = $region60
      $region59: #{tpu_custom_call.1} parent=5 // pred_region
        %s350 = ssub.s32 %s21, 1
        // Predicated region
        $region61: #{tpu_custom_call.1} parent=59 // pred_check
          %p351 = pneg %p178
        $region62: #{tpu_custom_call.1} parent=59 // pred_check_branch
          %353 = sbr.rel (%p351) target = $region64
        $region63: #{tpu_custom_call.1} parent=59 // pred_region
          %354 = dma.done [#allocation4], 256
        $region64: #{tpu_custom_call.1} parent=59 // pred_fallthru
          _
        // Predicated region
        $region65: #{tpu_custom_call.1} parent=59 // pred_check
          %p355 = pneg %p199
        $region66: #{tpu_custom_call.1} parent=59 // pred_check_branch
          %357 = sbr.rel (%p355) target = $region68
        $region67: #{tpu_custom_call.1} parent=59 // pred_region
          %358 = dma.done [#allocation7], 256
        $region68: #{tpu_custom_call.1} parent=59 // pred_fallthru
          _
        %p359 = scmp.lt.s32.totalorder %s26, 1
        %s360 = scalar_select %p359, %s26, 1
        %s361 = smul.addr %s360, 8
        %s362 = scalar_lea.vmem %s0, %s361
        %p363 = pneg %p47
        %p364 = pneg %p44
        %p365 = scmp.lt.s32.totalorder %s26, 1
        %s366 = scalar_select %p365, %s26, 1
        %s367 = smul.addr %s366, 8
        %s368 = scalar_lea.vmem %s1, %s367
        %p369 = pneg %p73
        %p370 = pneg %p70
        %p371 = pneg %p94
        %p372 = pneg %p91
        %p373 = pneg %p115
        %p374 = pneg %p112
        %p375 = pneg %p136
        %p376 = pneg %p133
        %p377 = pneg %p157
        %p378 = pneg %p154
        %p379 = pneg %p178
        %p380 = pneg %p175
        %p381 = pneg %p199
        %p382 = pneg %p196
        %p383 = pneg %p220
        %p384 = pneg %p217
        %p385 = pneg %p241
        %p386 = pneg %p238
        %p387 = pneg %p267
        %p388 = pneg %p264
        %s389 = sand.u32 %s254, 1
        %s390 = scalar_lea.sflag [#allocation5], %s389
        %s391 = sand.u32 %s254, 1
        %s392 = smul.addr %s391, 8
        %s393 = scalar_lea.vmem [#allocation8], %s392
        %p394 = scmp.lt.s32.totalorder %s26, 1
        %s395 = scalar_select %p394, %s26, 1
        %s396 = smul.addr %s395, 8
        %s397 = scalar_lea.vmem %s0, %s396
        %p398 = scmp.lt.s32.totalorder %s26, 1
        %s399 = scalar_select %p398, %s26, 1
        %s400 = smul.addr %s399, 8
        %s401 = scalar_lea.vmem %s1, %s400
        %v403 = vld [vmem:[%s397] sm:$0xff]
        %v404 = vld [vmem:[%s401] sm:$0xff]
        %v405 = vld [vmem:[%s9] sm:$0xff]
        %v406 = vld [vmem:[%s9 + $0x8] sm:$0xff]
        %v407 = vpack.c.bf16 %v403, %v403
        %v408 = vld [vmem:[%s2] sm:$0xf]
        %v409 = vld [vmem:[%s2 + $0x4] sm:$0xf]
        %v410 = vld [vmem:[%s2 + $0x8] sm:$0xf]
        %v411 = vld [vmem:[%s2 + $0xc] sm:$0xf]
        %v412 = vlaneseq
        %v413 = vshrl.u32 %v412, 7
        %v414 = vsub.s32 0, %v413
        %v415 = vrot.slane %v405, %v414
        %v420 = vunpack.c.l.b16 %v408
        %v421 = vunpack.c.l.b16 %v409
        %v422 = vunpack.c.l.b16 %v410
        %v423 = vunpack.c.l.b16 %v411
        %v424 = vpack.c.b16 %v421, %v420
        %v425 = vpack.c.b16 %v423, %v422
        %vm428 = vcmask 261120
        %v430 = vsel %vm428, %v407, 0
        %432 = vmatprep.subr.bf16.mxu0 0
        %433 = vmatpush1.bf16.msra.mxu0 %v424
        %434 = vmatprep.subr.bf16.mxu0 0
        %435 = vmatpush1.bf16.msra.mxu0 %v425
        %436 = vmatprep.subr.bf16.mxu0 0
        %437 = vmatpush1.bf16.msra.mxu0 0
        %438 = vmatprep.subr.bf16.mxu0 0
        %439 = vmatpush1.bf16.msra.mxu0 0
        %440 = vmatprep.subr.bf16.mxu0 0
        %441 = vmatpush1.bf16.msra.mxu0 0
        %442 = vmatprep.subr.bf16.mxu0 0
        %443 = vmatpush1.bf16.msra.mxu0 0
        %444 = vmatprep.subr.bf16.mxu0 0
        %445 = vmatpush1.bf16.msra.mxu0 0
        %446 = vmatprep.subr.bf16.mxu0 0
        %447 = vmatpush1.bf16.msra.mxu0 0
        %448 = vmatprep.subr.bf16.mxu0 0
        %449 = vmatpush1.bf16.msra.mxu0 0
        %450 = vmatprep.subr.bf16.mxu0 0
        %451 = vmatpush1.bf16.msra.mxu0 0
        %452 = vmatprep.subr.bf16.mxu0 0
        %453 = vmatpush1.bf16.msra.mxu0 0
        %454 = vmatprep.subr.bf16.mxu0 0
        %455 = vmatpush1.bf16.msra.mxu0 0
        %456 = vmatprep.subr.bf16.mxu0 0
        %457 = vmatpush1.bf16.msra.mxu0 0
        %458 = vmatprep.subr.bf16.mxu0 0
        %459 = vmatpush1.bf16.msra.mxu0 0
        %460 = vmatprep.subr.bf16.mxu0 0
        %461 = vmatpush1.bf16.msra.mxu0 0
        %462 = vmatprep.subr.bf16.mxu0 0
        %463 = vmatpush1.bf16.msra.mxu0 0
        %464 = vmatprep.mubr.bf16.mxu0 0
        %465 = vmatmul.mubr.bf16.gmra.mrb[0].mxu0 %v430
        %v466 = vpop.f32.mrb[0].mxu0
        %v467 = vadd.f32 %v415, %v466
        %v468 = vpop.f32.mrb[0].mxu0
        %v469 = vpop.f32.mrb[0].mxu0
        %v470 = vpop.f32.mrb[0].mxu0
        %471 = vdwg.mxu0
        %v472 = vmul.f32 %v467, 0.35355338
        %v473 = vpack.c.bf16 %v472, %v472
        %v474 = vpack.c.bf16 %v467, %v467
        %476 = vrot.lane.b32.xlu0 %v474, 96
        %v477 = vpop.permute.xlu0 %476
        %vm478 = vcmask 64512
        %v480 = vsel %vm478, %v473, 0
        %v483 = vsel %vm478, %v477, 0
        %485 = vmatprep.subr.bf16.mxu0 0
        %486 = vmatpush1.bf16.xpose.msra.mxu0 %v483
        %487 = vmatprep.subr.bf16.mxu0 0
        %488 = vmatpush1.bf16.xpose.msra.mxu0 0
        %489 = vmatprep.subr.bf16.mxu0 0
        %490 = vmatpush1.bf16.xpose.msra.mxu0 0
        %491 = vmatprep.subr.bf16.mxu0 0
        %492 = vmatpush1.bf16.xpose.msra.mxu0 0
        %493 = vmatprep.subr.bf16.mxu0 0
        %494 = vmatpush1.bf16.xpose.msra.mxu0 0
        %495 = vmatprep.subr.bf16.mxu0 0
        %496 = vmatpush1.bf16.xpose.msra.mxu0 0
        %497 = vmatprep.subr.bf16.mxu0 0
        %498 = vmatpush1.bf16.xpose.msra.mxu0 0
        %499 = vmatprep.subr.bf16.mxu0 0
        %500 = vmatpush1.bf16.xpose.msra.mxu0 0
        %501 = vmatprep.subr.bf16.mxu0 0
        %502 = vmatpush1.bf16.xpose.msra.mxu0 0
        %503 = vmatprep.subr.bf16.mxu0 0
        %504 = vmatpush1.bf16.xpose.msra.mxu0 0
        %505 = vmatprep.subr.bf16.mxu0 0
        %506 = vmatpush1.bf16.xpose.msra.mxu0 0
        %507 = vmatprep.subr.bf16.mxu0 0
        %508 = vmatpush1.bf16.xpose.msra.mxu0 0
        %509 = vmatprep.subr.bf16.mxu0 0
        %510 = vmatpush1.bf16.xpose.msra.mxu0 0
        %511 = vmatprep.subr.bf16.mxu0 0
        %512 = vmatpush1.bf16.xpose.msra.mxu0 0
        %513 = vmatprep.subr.bf16.mxu0 0
        %514 = vmatpush1.bf16.xpose.msra.mxu0 0
        %515 = vmatprep.subr.bf16.mxu0 0
        %516 = vmatpush1.bf16.xpose.msra.mxu0 0
        %517 = vmatprep.mubr.bf16.mxu0 0
        %518 = vmatmul.mubr.bf16.gmra.mrb[0].mxu0 %v480
        %v519 = vpop.f32.mrb[0].mxu0
        %v520 = vadd.f32 0.0, %v519
        %v521 = vpop.f32.mrb[0].mxu0
        %v522 = vpop.f32.mrb[0].mxu0
        %v523 = vpop.f32.mrb[0].mxu0
        %524 = vdwg.mxu0
        %v525 = vsel %vm478, %v520, -inf
        %526 = vmax.xlane.f32.xlu0 %v525
        %v527 = vpop.xlane.xlu0 %526
        %v528 = vsub.f32 %v520, %v527
        %v529 = vmul.f32 %v528, 1.442695
        %v530 = vpow.pop %v529
        %v531 = vsel %vm478, %v530, 0.0
        %532 = vadd.xlane.f32.xlu0 %v531
        %v533 = vpop.xlane.xlu0 %532
        %v534 = vrcp.pop %v533
        %v535 = vpack.c.bf16 %v530, %v530
        %536 = vrot.lane.b32.xlu0 %v474, 64
        %v537 = vpop.permute.xlu0 %536
        %v539 = vsel %vm478, %v535, 0
        %vm541 = vcmask 1043456
        %v543 = vsel %vm541, %v537, 0
        %545 = vmatprep.subr.bf16.mxu0 0
        %546 = vmatpush1.bf16.msra.mxu0 %v543
        %547 = vmatprep.subr.bf16.mxu0 0
        %548 = vmatpush1.bf16.msra.mxu0 0
        %549 = vmatprep.subr.bf16.mxu0 0
        %550 = vmatpush1.bf16.msra.mxu0 0
        %551 = vmatprep.subr.bf16.mxu0 0
        %552 = vmatpush1.bf16.msra.mxu0 0
        %553 = vmatprep.subr.bf16.mxu0 0
        %554 = vmatpush1.bf16.msra.mxu0 0
        %555 = vmatprep.subr.bf16.mxu0 0
        %556 = vmatpush1.bf16.msra.mxu0 0
        %557 = vmatprep.subr.bf16.mxu0 0
        %558 = vmatpush1.bf16.msra.mxu0 0
        %559 = vmatprep.subr.bf16.mxu0 0
        %560 = vmatpush1.bf16.msra.mxu0 0
        %561 = vmatprep.subr.bf16.mxu0 0
        %562 = vmatpush1.bf16.msra.mxu0 0
        %563 = vmatprep.subr.bf16.mxu0 0
        %564 = vmatpush1.bf16.msra.mxu0 0
        %565 = vmatprep.subr.bf16.mxu0 0
        %566 = vmatpush1.bf16.msra.mxu0 0
        %567 = vmatprep.subr.bf16.mxu0 0
        %568 = vmatpush1.bf16.msra.mxu0 0
        %569 = vmatprep.subr.bf16.mxu0 0
        %570 = vmatpush1.bf16.msra.mxu0 0
        %571 = vmatprep.subr.bf16.mxu0 0
        %572 = vmatpush1.bf16.msra.mxu0 0
        %573 = vmatprep.subr.bf16.mxu0 0
        %574 = vmatpush1.bf16.msra.mxu0 0
        %575 = vmatprep.subr.bf16.mxu0 0
        %576 = vmatpush1.bf16.msra.mxu0 0
        %577 = vmatprep.mubr.bf16.mxu0 0
        %578 = vmatmul.mubr.bf16.gmra.mrb[0].mxu0 %v539
        %v579 = vpop.f32.mrb[0].mxu0
        %v580 = vadd.f32 0.0, %v579
        %v581 = vpop.f32.mrb[0].mxu0
        %v582 = vpop.f32.mrb[0].mxu0
        %v583 = vpop.f32.mrb[0].mxu0
        %584 = vdwg.mxu0
        %v585 = vmul.f32 %v580, %v534
        %v586 = vpack.c.bf16 %v585, %v585
        %vm587 = vcmask 60416
        %588 = vst.msk [vmem:[#allocation2] sm:$0xf] %vm587, %v586
        %590 = vrot.lane.b32.xlu0 %v473, 120
        %v591 = vpop.permute.xlu0 %590
        %592 = vrot.lane.b32.xlu0 %v474, 88
        %v593 = vpop.permute.xlu0 %592
        %v595 = vsel %vm478, %v591, 0
        %v598 = vsel %vm478, %v593, 0
        %600 = vmatprep.subr.bf16.mxu0 0
        %601 = vmatpush1.bf16.xpose.msra.mxu0 %v598
        %602 = vmatprep.subr.bf16.mxu0 0
        %603 = vmatpush1.bf16.xpose.msra.mxu0 0
        %604 = vmatprep.subr.bf16.mxu0 0
        %605 = vmatpush1.bf16.xpose.msra.mxu0 0
        %606 = vmatprep.subr.bf16.mxu0 0
        %607 = vmatpush1.bf16.xpose.msra.mxu0 0
        %608 = vmatprep.subr.bf16.mxu0 0
        %609 = vmatpush1.bf16.xpose.msra.mxu0 0
        %610 = vmatprep.subr.bf16.mxu0 0
        %611 = vmatpush1.bf16.xpose.msra.mxu0 0
        %612 = vmatprep.subr.bf16.mxu0 0
        %613 = vmatpush1.bf16.xpose.msra.mxu0 0
        %614 = vmatprep.subr.bf16.mxu0 0
        %615 = vmatpush1.bf16.xpose.msra.mxu0 0
        %616 = vmatprep.subr.bf16.mxu0 0
        %617 = vmatpush1.bf16.xpose.msra.mxu0 0
        %618 = vmatprep.subr.bf16.mxu0 0
        %619 = vmatpush1.bf16.xpose.msra.mxu0 0
        %620 = vmatprep.subr.bf16.mxu0 0
        %621 = vmatpush1.bf16.xpose.msra.mxu0 0
        %622 = vmatprep.subr.bf16.mxu0 0
        %623 = vmatpush1.bf16.xpose.msra.mxu0 0
        %624 = vmatprep.subr.bf16.mxu0 0
        %625 = vmatpush1.bf16.xpose.msra.mxu0 0
        %626 = vmatprep.subr.bf16.mxu0 0
        %627 = vmatpush1.bf16.xpose.msra.mxu0 0
        %628 = vmatprep.subr.bf16.mxu0 0
        %629 = vmatpush1.bf16.xpose.msra.mxu0 0
        %630 = vmatprep.subr.bf16.mxu0 0
        %631 = vmatpush1.bf16.xpose.msra.mxu0 0
        %632 = vmatprep.mubr.bf16.mxu0 0
        %633 = vmatmul.mubr.bf16.gmra.mrb[0].mxu0 %v595
        %v634 = vpop.f32.mrb[0].mxu0
        %v635 = vadd.f32 0.0, %v634
        %v636 = vpop.f32.mrb[0].mxu0
        %v637 = vpop.f32.mrb[0].mxu0
        %v638 = vpop.f32.mrb[0].mxu0
        %639 = vdwg.mxu0
        %v640 = vsel %vm478, %v635, -inf
        %641 = vmax.xlane.f32.xlu0 %v640
        %v642 = vpop.xlane.xlu0 %641
        %v643 = vsub.f32 %v635, %v642
        %v644 = vmul.f32 %v643, 1.442695
        %v645 = vpow.pop %v644
        %v646 = vsel %vm478, %v645, 0.0
        %647 = vadd.xlane.f32.xlu0 %v646
        %v648 = vpop.xlane.xlu0 %647
        %v649 = vrcp.pop %v648
        %v650 = vpack.c.bf16 %v645, %v645
        %651 = vrot.lane.b32.xlu0 %v474, 56
        %v652 = vpop.permute.xlu0 %651
        %v654 = vsel %vm478, %v650, 0
        %v657 = vsel %vm541, %v652, 0
        %659 = vmatprep.subr.bf16.mxu0 0
        %660 = vmatpush1.bf16.msra.mxu0 %v657
        %661 = vmatprep.subr.bf16.mxu0 0
        %662 = vmatpush1.bf16.msra.mxu0 0
        %663 = vmatprep.subr.bf16.mxu0 0
        %664 = vmatpush1.bf16.msra.mxu0 0
        %665 = vmatprep.subr.bf16.mxu0 0
        %666 = vmatpush1.bf16.msra.mxu0 0
        %667 = vmatprep.subr.bf16.mxu0 0
        %668 = vmatpush1.bf16.msra.mxu0 0
        %669 = vmatprep.subr.bf16.mxu0 0
        %670 = vmatpush1.bf16.msra.mxu0 0
        %671 = vmatprep.subr.bf16.mxu0 0
        %672 = vmatpush1.bf16.msra.mxu0 0
        %673 = vmatprep.subr.bf16.mxu0 0
        %674 = vmatpush1.bf16.msra.mxu0 0
        %675 = vmatprep.subr.bf16.mxu0 0
        %676 = vmatpush1.bf16.msra.mxu0 0
        %677 = vmatprep.subr.bf16.mxu0 0
        %678 = vmatpush1.bf16.msra.mxu0 0
        %679 = vmatprep.subr.bf16.mxu0 0
        %680 = vmatpush1.bf16.msra.mxu0 0
        %681 = vmatprep.subr.bf16.mxu0 0
        %682 = vmatpush1.bf16.msra.mxu0 0
        %683 = vmatprep.subr.bf16.mxu0 0
        %684 = vmatpush1.bf16.msra.mxu0 0
        %685 = vmatprep.subr.bf16.mxu0 0
        %686 = vmatpush1.bf16.msra.mxu0 0
        %687 = vmatprep.subr.bf16.mxu0 0
        %688 = vmatpush1.bf16.msra.mxu0 0
        %689 = vmatprep.subr.bf16.mxu0 0
        %690 = vmatpush1.bf16.msra.mxu0 0
        %691 = vmatprep.mubr.bf16.mxu0 0
        %692 = vmatmul.mubr.bf16.gmra.mrb[0].mxu0 %v654
        %v693 = vpop.f32.mrb[0].mxu0
        %v694 = vadd.f32 0.0, %v693
        %v695 = vpop.f32.mrb[0].mxu0
        %v696 = vpop.f32.mrb[0].mxu0
        %v697 = vpop.f32.mrb[0].mxu0
        %698 = vdwg.mxu0
        %v699 = vmul.f32 %v694, %v649
        %v700 = vpack.c.bf16 %v699, %v699
        %v702 = vunpack.c.l.b16 %v700
        %v703 = vpack.c.b16 %v702, %v702
        %704 = vrot.lane.b32.xlu0 %v703, 8
        %v705 = vpop.permute.xlu0 %704
        %vm707 = vcmask 126016
        %708 = vst.msk [vmem:[#allocation2] sm:$0xf] %vm707, %v705
        %709 = vrot.lane.b32.xlu0 %v473, 112
        %v710 = vpop.permute.xlu0 %709
        %711 = vrot.lane.b32.xlu0 %v474, 80
        %v712 = vpop.permute.xlu0 %711
        %v714 = vsel %vm478, %v710, 0
        %v717 = vsel %vm478, %v712, 0
        %719 = vmatprep.subr.bf16.mxu0 0
        %720 = vmatpush1.bf16.xpose.msra.mxu0 %v717
        %721 = vmatprep.subr.bf16.mxu0 0
        %722 = vmatpush1.bf16.xpose.msra.mxu0 0
        %723 = vmatprep.subr.bf16.mxu0 0
        %724 = vmatpush1.bf16.xpose.msra.mxu0 0
        %725 = vmatprep.subr.bf16.mxu0 0
        %726 = vmatpush1.bf16.xpose.msra.mxu0 0
        %727 = vmatprep.subr.bf16.mxu0 0
        %728 = vmatpush1.bf16.xpose.msra.mxu0 0
        %729 = vmatprep.subr.bf16.mxu0 0
        %730 = vmatpush1.bf16.xpose.msra.mxu0 0
        %731 = vmatprep.subr.bf16.mxu0 0
        %732 = vmatpush1.bf16.xpose.msra.mxu0 0
        %733 = vmatprep.subr.bf16.mxu0 0
        %734 = vmatpush1.bf16.xpose.msra.mxu0 0
        %735 = vmatprep.subr.bf16.mxu0 0
        %736 = vmatpush1.bf16.xpose.msra.mxu0 0
        %737 = vmatprep.subr.bf16.mxu0 0
        %738 = vmatpush1.bf16.xpose.msra.mxu0 0
        %739 = vmatprep.subr.bf16.mxu0 0
        %740 = vmatpush1.bf16.xpose.msra.mxu0 0
        %741 = vmatprep.subr.bf16.mxu0 0
        %742 = vmatpush1.bf16.xpose.msra.mxu0 0
        %743 = vmatprep.subr.bf16.mxu0 0
        %744 = vmatpush1.bf16.xpose.msra.mxu0 0
        %745 = vmatprep.subr.bf16.mxu0 0
        %746 = vmatpush1.bf16.xpose.msra.mxu0 0
        %747 = vmatprep.subr.bf16.mxu0 0
        %748 = vmatpush1.bf16.xpose.msra.mxu0 0
        %749 = vmatprep.subr.bf16.mxu0 0
        %750 = vmatpush1.bf16.xpose.msra.mxu0 0
        %751 = vmatprep.mubr.bf16.mxu0 0
        %752 = vmatmul.mubr.bf16.gmra.mrb[0].mxu0 %v714
        %v753 = vpop.f32.mrb[0].mxu0
        %v754 = vadd.f32 0.0, %v753
        %v755 = vpop.f32.mrb[0].mxu0
        %v756 = vpop.f32.mrb[0].mxu0
        %v757 = vpop.f32.mrb[0].mxu0
        %758 = vdwg.mxu0
        %v759 = vsel %vm478, %v754, -inf
        %760 = vmax.xlane.f32.xlu0 %v759
        %v761 = vpop.xlane.xlu0 %760
        %v762 = vsub.f32 %v754, %v761
        %v763 = vmul.f32 %v762, 1.442695
        %v764 = vpow.pop %v763
        %v765 = vsel %vm478, %v764, 0.0
        %766 = vadd.xlane.f32.xlu0 %v765
        %v767 = vpop.xlane.xlu0 %766
        %v768 = vrcp.pop %v767
        %v769 = vpack.c.bf16 %v764, %v764
        %770 = vrot.lane.b32.xlu0 %v474, 48
        %v771 = vpop.permute.xlu0 %770
        %v773 = vsel %vm478, %v769, 0
        %v776 = vsel %vm541, %v771, 0
        %778 = vmatprep.subr.bf16.mxu0 0
        %779 = vmatpush1.bf16.msra.mxu0 %v776
        %780 = vmatprep.subr.bf16.mxu0 0
        %781 = vmatpush1.bf16.msra.mxu0 0
        %782 = vmatprep.subr.bf16.mxu0 0
        %783 = vmatpush1.bf16.msra.mxu0 0
        %784 = vmatprep.subr.bf16.mxu0 0
        %785 = vmatpush1.bf16.msra.mxu0 0
        %786 = vmatprep.subr.bf16.mxu0 0
        %787 = vmatpush1.bf16.msra.mxu0 0
        %788 = vmatprep.subr.bf16.mxu0 0
        %789 = vmatpush1.bf16.msra.mxu0 0
        %790 = vmatprep.subr.bf16.mxu0 0
        %791 = vmatpush1.bf16.msra.mxu0 0
        %792 = vmatprep.subr.bf16.mxu0 0
        %793 = vmatpush1.bf16.msra.mxu0 0
        %794 = vmatprep.subr.bf16.mxu0 0
        %795 = vmatpush1.bf16.msra.mxu0 0
        %796 = vmatprep.subr.bf16.mxu0 0
        %797 = vmatpush1.bf16.msra.mxu0 0
        %798 = vmatprep.subr.bf16.mxu0 0
        %799 = vmatpush1.bf16.msra.mxu0 0
        %800 = vmatprep.subr.bf16.mxu0 0
        %801 = vmatpush1.bf16.msra.mxu0 0
        %802 = vmatprep.subr.bf16.mxu0 0
        %803 = vmatpush1.bf16.msra.mxu0 0
        %804 = vmatprep.subr.bf16.mxu0 0
        %805 = vmatpush1.bf16.msra.mxu0 0
        %806 = vmatprep.subr.bf16.mxu0 0
        %807 = vmatpush1.bf16.msra.mxu0 0
        %808 = vmatprep.subr.bf16.mxu0 0
        %809 = vmatpush1.bf16.msra.mxu0 0
        %810 = vmatprep.mubr.bf16.mxu0 0
        %811 = vmatmul.mubr.bf16.gmra.mrb[0].mxu0 %v773
        %v812 = vpop.f32.mrb[0].mxu0
        %v813 = vadd.f32 0.0, %v812
        %v814 = vpop.f32.mrb[0].mxu0
        %v815 = vpop.f32.mrb[0].mxu0
        %v816 = vpop.f32.mrb[0].mxu0
        %817 = vdwg.mxu0
        %v818 = vmul.f32 %v813, %v768
        %v819 = vpack.c.bf16 %v818, %v818
        %v821 = vunpack.c.l.b16 %v819
        %v822 = vpack.c.b16 %v821, %v821
        %823 = vrot.lane.b32.xlu0 %v822, 16
        %v824 = vpop.permute.xlu0 %823
        %vm826 = vcmask 191616
        %827 = vst.msk [vmem:[#allocation2] sm:$0xf] %vm826, %v824
        %828 = vrot.lane.b32.xlu0 %v473, 104
        %v829 = vpop.permute.xlu0 %828
        %830 = vrot.lane.b32.xlu0 %v474, 72
        %v831 = vpop.permute.xlu0 %830
        %v833 = vsel %vm478, %v829, 0
        %v836 = vsel %vm478, %v831, 0
        %838 = vmatprep.subr.bf16.mxu0 0
        %839 = vmatpush1.bf16.xpose.msra.mxu0 %v836
        %840 = vmatprep.subr.bf16.mxu0 0
        %841 = vmatpush1.bf16.xpose.msra.mxu0 0
        %842 = vmatprep.subr.bf16.mxu0 0
        %843 = vmatpush1.bf16.xpose.msra.mxu0 0
        %844 = vmatprep.subr.bf16.mxu0 0
        %845 = vmatpush1.bf16.xpose.msra.mxu0 0
        %846 = vmatprep.subr.bf16.mxu0 0
        %847 = vmatpush1.bf16.xpose.msra.mxu0 0
        %848 = vmatprep.subr.bf16.mxu0 0
        %849 = vmatpush1.bf16.xpose.msra.mxu0 0
        %850 = vmatprep.subr.bf16.mxu0 0
        %851 = vmatpush1.bf16.xpose.msra.mxu0 0
        %852 = vmatprep.subr.bf16.mxu0 0
        %853 = vmatpush1.bf16.xpose.msra.mxu0 0
        %854 = vmatprep.subr.bf16.mxu0 0
        %855 = vmatpush1.bf16.xpose.msra.mxu0 0
        %856 = vmatprep.subr.bf16.mxu0 0
        %857 = vmatpush1.bf16.xpose.msra.mxu0 0
        %858 = vmatprep.subr.bf16.mxu0 0
        %859 = vmatpush1.bf16.xpose.msra.mxu0 0
        %860 = vmatprep.subr.bf16.mxu0 0
        %861 = vmatpush1.bf16.xpose.msra.mxu0 0
        %862 = vmatprep.subr.bf16.mxu0 0
        %863 = vmatpush1.bf16.xpose.msra.mxu0 0
        %864 = vmatprep.subr.bf16.mxu0 0
        %865 = vmatpush1.bf16.xpose.msra.mxu0 0
        %866 = vmatprep.subr.bf16.mxu0 0
        %867 = vmatpush1.bf16.xpose.msra.mxu0 0
        %868 = vmatprep.subr.bf16.mxu0 0
        %869 = vmatpush1.bf16.xpose.msra.mxu0 0
        %870 = vmatprep.mubr.bf16.mxu0 0
        %871 = vmatmul.mubr.bf16.gmra.mrb[0].mxu0 %v833
        %v872 = vpop.f32.mrb[0].mxu0
        %v873 = vadd.f32 0.0, %v872
        %v874 = vpop.f32.mrb[0].mxu0
        %v875 = vpop.f32.mrb[0].mxu0
        %v876 = vpop.f32.mrb[0].mxu0
        %877 = vdwg.mxu0
        %v878 = vsel %vm478, %v873, -inf
        %879 = vmax.xlane.f32.xlu0 %v878
        %v880 = vpop.xlane.xlu0 %879
        %v881 = vsub.f32 %v873, %v880
        %v882 = vmul.f32 %v881, 1.442695
        %v883 = vpow.pop %v882
        %v884 = vsel %vm478, %v883, 0.0
        %885 = vadd.xlane.f32.xlu0 %v884
        %v886 = vpop.xlane.xlu0 %885
        %v887 = vrcp.pop %v886
        %v888 = vpack.c.bf16 %v883, %v883
        %889 = vrot.lane.b32.xlu0 %v474, 40
        %v890 = vpop.permute.xlu0 %889
        %v892 = vsel %vm478, %v888, 0
        %v895 = vsel %vm541, %v890, 0
        %897 = vmatprep.subr.bf16.mxu0 0
        %898 = vmatpush1.bf16.msra.mxu0 %v895
        %899 = vmatprep.subr.bf16.mxu0 0
        %900 = vmatpush1.bf16.msra.mxu0 0
        %901 = vmatprep.subr.bf16.mxu0 0
        %902 = vmatpush1.bf16.msra.mxu0 0
        %903 = vmatprep.subr.bf16.mxu0 0
        %904 = vmatpush1.bf16.msra.mxu0 0
        %905 = vmatprep.subr.bf16.mxu0 0
        %906 = vmatpush1.bf16.msra.mxu0 0
        %907 = vmatprep.subr.bf16.mxu0 0
        %908 = vmatpush1.bf16.msra.mxu0 0
        %909 = vmatprep.subr.bf16.mxu0 0
        %910 = vmatpush1.bf16.msra.mxu0 0
        %911 = vmatprep.subr.bf16.mxu0 0
        %912 = vmatpush1.bf16.msra.mxu0 0
        %913 = vmatprep.subr.bf16.mxu0 0
        %914 = vmatpush1.bf16.msra.mxu0 0
        %915 = vmatprep.subr.bf16.mxu0 0
        %916 = vmatpush1.bf16.msra.mxu0 0
        %917 = vmatprep.subr.bf16.mxu0 0
        %918 = vmatpush1.bf16.msra.mxu0 0
        %919 = vmatprep.subr.bf16.mxu0 0
        %920 = vmatpush1.bf16.msra.mxu0 0
        %921 = vmatprep.subr.bf16.mxu0 0
        %922 = vmatpush1.bf16.msra.mxu0 0
        %923 = vmatprep.subr.bf16.mxu0 0
        %924 = vmatpush1.bf16.msra.mxu0 0
        %925 = vmatprep.subr.bf16.mxu0 0
        %926 = vmatpush1.bf16.msra.mxu0 0
        %927 = vmatprep.subr.bf16.mxu0 0
        %928 = vmatpush1.bf16.msra.mxu0 0
        %929 = vmatprep.mubr.bf16.mxu0 0
        %930 = vmatmul.mubr.bf16.gmra.mrb[0].mxu0 %v892
        %v931 = vpop.f32.mrb[0].mxu0
        %v932 = vadd.f32 0.0, %v931
        %v933 = vpop.f32.mrb[0].mxu0
        %v934 = vpop.f32.mrb[0].mxu0
        %v935 = vpop.f32.mrb[0].mxu0
        %936 = vdwg.mxu0
        %v937 = vmul.f32 %v932, %v887
        %v938 = vpack.c.bf16 %v937, %v937
        %v940 = vunpack.c.l.b16 %v938
        %v941 = vpack.c.b16 %v940, %v940
        %942 = vrot.lane.b32.xlu0 %v941, 24
        %v943 = vpop.permute.xlu0 %942
        %vm945 = vcmask 257216
        %946 = vst.msk [vmem:[#allocation2] sm:$0xf] %vm945, %v943
        %v947 = vld [vmem:[#allocation2] sm:$0xf]
        %v948 = vld [vmem:[%s3] sm:$0xf]
        %v949 = vld [vmem:[%s3 + $0x4] sm:$0xf]
        %v950 = vld [vmem:[%s3 + $0x8] sm:$0xf]
        %v951 = vld [vmem:[%s3 + $0xc] sm:$0xf]
        %v952 = vlaneseq
        %v953 = vshrl.u32 %v952, 7
        %v954 = vsub.s32 1, %v953
        %v955 = vrot.slane %v405, %v954
        %v960 = vunpack.c.l.b16 %v948
        %v961 = vunpack.c.l.b16 %v949
        %v962 = vunpack.c.l.b16 %v950
        %v963 = vunpack.c.l.b16 %v951
        %v964 = vpack.c.b16 %v961, %v960
        %v965 = vpack.c.b16 %v963, %v962
        %v969 = vsel %vm428, %v947, 0
        %971 = vmatprep.subr.bf16.mxu0 0
        %972 = vmatpush1.bf16.msra.mxu0 %v964
        %973 = vmatprep.subr.bf16.mxu0 0
        %974 = vmatpush1.bf16.msra.mxu0 %v965
        %975 = vmatprep.subr.bf16.mxu0 0
        %976 = vmatpush1.bf16.msra.mxu0 0
        %977 = vmatprep.subr.bf16.mxu0 0
        %978 = vmatpush1.bf16.msra.mxu0 0
        %979 = vmatprep.subr.bf16.mxu0 0
        %980 = vmatpush1.bf16.msra.mxu0 0
        %981 = vmatprep.subr.bf16.mxu0 0
        %982 = vmatpush1.bf16.msra.mxu0 0
        %983 = vmatprep.subr.bf16.mxu0 0
        %984 = vmatpush1.bf16.msra.mxu0 0
        %985 = vmatprep.subr.bf16.mxu0 0
        %986 = vmatpush1.bf16.msra.mxu0 0
        %987 = vmatprep.subr.bf16.mxu0 0
        %988 = vmatpush1.bf16.msra.mxu0 0
        %989 = vmatprep.subr.bf16.mxu0 0
        %990 = vmatpush1.bf16.msra.mxu0 0
        %991 = vmatprep.subr.bf16.mxu0 0
        %992 = vmatpush1.bf16.msra.mxu0 0
        %993 = vmatprep.subr.bf16.mxu0 0
        %994 = vmatpush1.bf16.msra.mxu0 0
        %995 = vmatprep.subr.bf16.mxu0 0
        %996 = vmatpush1.bf16.msra.mxu0 0
        %997 = vmatprep.subr.bf16.mxu0 0
        %998 = vmatpush1.bf16.msra.mxu0 0
        %999 = vmatprep.subr.bf16.mxu0 0
        %1000 = vmatpush1.bf16.msra.mxu0 0
        %1001 = vmatprep.subr.bf16.mxu0 0
        %1002 = vmatpush1.bf16.msra.mxu0 0
        %1003 = vmatprep.mubr.bf16.mxu0 0
        %1004 = vmatmul.mubr.bf16.gmra.mrb[0].mxu0 %v969
        %v1005 = vpop.f32.mrb[0].mxu0
        %v1006 = vadd.f32 %v955, %v1005
        %v1007 = vpop.f32.mrb[0].mxu0
        %v1008 = vpop.f32.mrb[0].mxu0
        %v1009 = vpop.f32.mrb[0].mxu0
        %1010 = vdwg.mxu0
        %v1011 = vadd.f32 %v403, %v1006
        %v1012 = vsel %vm428, %v1011, 0.0
        %1013 = vadd.xlane.f32.xlu0 %v1012
        %v1014 = vpop.xlane.xlu0 %1013
        %v1015 = vrcp.pop 32.0
        %v1016 = vmul.f32 %v1014, %v1015
        %v1017 = vsub.f32 %v1011, %v1016
        %v1018 = vmul.f32 %v1017, %v1017
        %v1019 = vsel %vm428, %v1018, 0.0
        %1020 = vadd.xlane.f32.xlu0 %v1019
        %v1021 = vpop.xlane.xlu0 %1020
        %v1022 = vmul.f32 %v1021, %v1015
        %v1023 = vadd.f32 %v1022, 1e-05
        %v1024 = vrsqrt.pop %v1023
        %v1025 = vmul.f32 %v1017, %v1024
        %v1026 = vlaneseq
        %v1027 = vshrl.u32 %v1026, 7
        %v1028 = vsub.s32 2, %v1027
        %v1029 = vrot.slane %v405, %v1028
        %v1030 = vmul.f32 %v1025, %v1029
        %v1031 = vlaneseq
        %v1032 = vshrl.u32 %v1031, 7
        %v1033 = vsub.s32 3, %v1032
        %v1034 = vrot.slane %v405, %v1033
        %v1035 = vadd.f32 %v1030, %v1034
        %v1036 = vpack.c.bf16 %v1035, %v1035
        %v1037 = vld [vmem:[%s4] sm:$0xf]
        %v1038 = vld [vmem:[%s4 + $0x4] sm:$0xf]
        %v1039 = vld [vmem:[%s4 + $0x8] sm:$0xf]
        %v1040 = vld [vmem:[%s4 + $0xc] sm:$0xf]
        %v1041 = vlaneseq
        %v1042 = vshrl.u32 %v1041, 7
        %v1043 = vsub.s32 4, %v1042
        %v1044 = vrot.slane %v405, %v1043
        %v1049 = vunpack.c.l.b16 %v1037
        %v1050 = vunpack.c.l.b16 %v1038
        %v1051 = vunpack.c.l.b16 %v1039
        %v1052 = vunpack.c.l.b16 %v1040
        %v1053 = vpack.c.b16 %v1050, %v1049
        %v1054 = vpack.c.b16 %v1052, %v1051
        %v1058 = vsel %vm428, %v1036, 0
        %1060 = vmatprep.subr.bf16.mxu0 0
        %1061 = vmatpush1.bf16.msra.mxu0 %v1053
        %1062 = vmatprep.subr.bf16.mxu0 0
        %1063 = vmatpush1.bf16.msra.mxu0 %v1054
        %1064 = vmatprep.subr.bf16.mxu0 0
        %1065 = vmatpush1.bf16.msra.mxu0 0
        %1066 = vmatprep.subr.bf16.mxu0 0
        %1067 = vmatpush1.bf16.msra.mxu0 0
        %1068 = vmatprep.subr.bf16.mxu0 0
        %1069 = vmatpush1.bf16.msra.mxu0 0
        %1070 = vmatprep.subr.bf16.mxu0 0
        %1071 = vmatpush1.bf16.msra.mxu0 0
        %1072 = vmatprep.subr.bf16.mxu0 0
        %1073 = vmatpush1.bf16.msra.mxu0 0
        %1074 = vmatprep.subr.bf16.mxu0 0
        %1075 = vmatpush1.bf16.msra.mxu0 0
        %1076 = vmatprep.subr.bf16.mxu0 0
        %1077 = vmatpush1.bf16.msra.mxu0 0
        %1078 = vmatprep.subr.bf16.mxu0 0
        %1079 = vmatpush1.bf16.msra.mxu0 0
        %1080 = vmatprep.subr.bf16.mxu0 0
        %1081 = vmatpush1.bf16.msra.mxu0 0
        %1082 = vmatprep.subr.bf16.mxu0 0
        %1083 = vmatpush1.bf16.msra.mxu0 0
        %1084 = vmatprep.subr.bf16.mxu0 0
        %1085 = vmatpush1.bf16.msra.mxu0 0
        %1086 = vmatprep.subr.bf16.mxu0 0
        %1087 = vmatpush1.bf16.msra.mxu0 0
        %1088 = vmatprep.subr.bf16.mxu0 0
        %1089 = vmatpush1.bf16.msra.mxu0 0
        %1090 = vmatprep.subr.bf16.mxu0 0
        %1091 = vmatpush1.bf16.msra.mxu0 0
        %1092 = vmatprep.mubr.bf16.mxu0 0
        %1093 = vmatmul.mubr.bf16.gmra.mrb[0].mxu0 %v1058
        %v1094 = vpop.f32.mrb[0].mxu0
        %v1095 = vadd.f32 %v1044, %v1094
        %v1096 = vpop.f32.mrb[0].mxu0
        %v1097 = vpop.f32.mrb[0].mxu0
        %v1098 = vpop.f32.mrb[0].mxu0
        %1099 = vdwg.mxu0
        %v1100 = vmul.f32 %v1095, 0.35355338
        %v1101 = vpack.c.bf16 %v1100, %v1100
        %v1102 = vpack.c.bf16 %v404, %v404
        %v1103 = vld [vmem:[%s5] sm:$0xf]
        %v1104 = vld [vmem:[%s5 + $0x4] sm:$0xf]
        %v1105 = vld [vmem:[%s5 + $0x8] sm:$0xf]
        %v1106 = vld [vmem:[%s5 + $0xc] sm:$0xf]
        %v1107 = vlaneseq
        %v1108 = vshrl.u32 %v1107, 7
        %v1109 = vsub.s32 5, %v1108
        %v1110 = vrot.slane %v405, %v1109
        %v1115 = vunpack.c.l.b16 %v1103
        %v1116 = vunpack.c.l.b16 %v1104
        %v1117 = vunpack.c.l.b16 %v1105
        %v1118 = vunpack.c.l.b16 %v1106
        %v1119 = vpack.c.b16 %v1116, %v1115
        %v1120 = vpack.c.b16 %v1118, %v1117
        %v1124 = vsel %vm428, %v1102, 0
        %1126 = vmatprep.subr.bf16.mxu0 0
        %1127 = vmatpush1.bf16.msra.mxu0 %v1119
        %1128 = vmatprep.subr.bf16.mxu0 0
        %1129 = vmatpush1.bf16.msra.mxu0 %v1120
        %1130 = vmatprep.subr.bf16.mxu0 0
        %1131 = vmatpush1.bf16.msra.mxu0 0
        %1132 = vmatprep.subr.bf16.mxu0 0
        %1133 = vmatpush1.bf16.msra.mxu0 0
        %1134 = vmatprep.subr.bf16.mxu0 0
        %1135 = vmatpush1.bf16.msra.mxu0 0
        %1136 = vmatprep.subr.bf16.mxu0 0
        %1137 = vmatpush1.bf16.msra.mxu0 0
        %1138 = vmatprep.subr.bf16.mxu0 0
        %1139 = vmatpush1.bf16.msra.mxu0 0
        %1140 = vmatprep.subr.bf16.mxu0 0
        %1141 = vmatpush1.bf16.msra.mxu0 0
        %1142 = vmatprep.subr.bf16.mxu0 0
        %1143 = vmatpush1.bf16.msra.mxu0 0
        %1144 = vmatprep.subr.bf16.mxu0 0
        %1145 = vmatpush1.bf16.msra.mxu0 0
        %1146 = vmatprep.subr.bf16.mxu0 0
        %1147 = vmatpush1.bf16.msra.mxu0 0
        %1148 = vmatprep.subr.bf16.mxu0 0
        %1149 = vmatpush1.bf16.msra.mxu0 0
        %1150 = vmatprep.subr.bf16.mxu0 0
        %1151 = vmatpush1.bf16.msra.mxu0 0
        %1152 = vmatprep.subr.bf16.mxu0 0
        %1153 = vmatpush1.bf16.msra.mxu0 0
        %1154 = vmatprep.subr.bf16.mxu0 0
        %1155 = vmatpush1.bf16.msra.mxu0 0
        %1156 = vmatprep.subr.bf16.mxu0 0
        %1157 = vmatpush1.bf16.msra.mxu0 0
        %1158 = vmatprep.mubr.bf16.mxu0 0
        %1159 = vmatmul.mubr.bf16.gmra.mrb[0].mxu0 %v1124
        %v1160 = vpop.f32.mrb[0].mxu0
        %v1161 = vadd.f32 %v1110, %v1160
        %v1162 = vpop.f32.mrb[0].mxu0
        %v1163 = vpop.f32.mrb[0].mxu0
        %v1164 = vpop.f32.mrb[0].mxu0
        %1165 = vdwg.mxu0
        %v1166 = vpack.c.bf16 %v1161, %v1161
        %v1168 = vsel %vm478, %v1101, 0
        %v1171 = vsel %vm478, %v1166, 0
        %1173 = vmatprep.subr.bf16.mxu0 0
        %1174 = vmatpush1.bf16.xpose.msra.mxu0 %v1171
        %1175 = vmatprep.subr.bf16.mxu0 0
        %1176 = vmatpush1.bf16.xpose.msra.mxu0 0
        %1177 = vmatprep.subr.bf16.mxu0 0
        %1178 = vmatpush1.bf16.xpose.msra.mxu0 0
        %1179 = vmatprep.subr.bf16.mxu0 0
        %1180 = vmatpush1.bf16.xpose.msra.mxu0 0
        %1181 = vmatprep.subr.bf16.mxu0 0
        %1182 = vmatpush1.bf16.xpose.msra.mxu0 0
        %1183 = vmatprep.subr.bf16.mxu0 0
        %1184 = vmatpush1.bf16.xpose.msra.mxu0 0
        %1185 = vmatprep.subr.bf16.mxu0 0
        %1186 = vmatpush1.bf16.xpose.msra.mxu0 0
        %1187 = vmatprep.subr.bf16.mxu0 0
        %1188 = vmatpush1.bf16.xpose.msra.mxu0 0
        %1189 = vmatprep.subr.bf16.mxu0 0
        %1190 = vmatpush1.bf16.xpose.msra.mxu0 0
        %1191 = vmatprep.subr.bf16.mxu0 0
        %1192 = vmatpush1.bf16.xpose.msra.mxu0 0
        %1193 = vmatprep.subr.bf16.mxu0 0
        %1194 = vmatpush1.bf16.xpose.msra.mxu0 0
        %1195 = vmatprep.subr.bf16.mxu0 0
        %1196 = vmatpush1.bf16.xpose.msra.mxu0 0
        %1197 = vmatprep.subr.bf16.mxu0 0
        %1198 = vmatpush1.bf16.xpose.msra.mxu0 0
        %1199 = vmatprep.subr.bf16.mxu0 0
        %1200 = vmatpush1.bf16.xpose.msra.mxu0 0
        %1201 = vmatprep.subr.bf16.mxu0 0
        %1202 = vmatpush1.bf16.xpose.msra.mxu0 0
        %1203 = vmatprep.subr.bf16.mxu0 0
        %1204 = vmatpush1.bf16.xpose.msra.mxu0 0
        %1205 = vmatprep.mubr.bf16.mxu0 0
        %1206 = vmatmul.mubr.bf16.gmra.mrb[0].mxu0 %v1168
        %v1207 = vpop.f32.mrb[0].mxu0
        %v1208 = vadd.f32 0.0, %v1207
        %v1209 = vpop.f32.mrb[0].mxu0
        %v1210 = vpop.f32.mrb[0].mxu0
        %v1211 = vpop.f32.mrb[0].mxu0
        %1212 = vdwg.mxu0
        %v1213 = vsel %vm478, %v1208, -inf
        %1214 = vmax.xlane.f32.xlu0 %v1213
        %v1215 = vpop.xlane.xlu0 %1214
        %v1216 = vsub.f32 %v1208, %v1215
        %v1217 = vmul.f32 %v1216, 1.442695
        %v1218 = vpow.pop %v1217
        %v1219 = vsel %vm478, %v1218, 0.0
        %1220 = vadd.xlane.f32.xlu0 %v1219
        %v1221 = vpop.xlane.xlu0 %1220
        %v1222 = vrcp.pop %v1221
        %v1223 = vpack.c.bf16 %v1218, %v1218
        %1225 = vrot.lane.b32.xlu0 %v1166, 96
        %v1226 = vpop.permute.xlu0 %1225
        %v1228 = vsel %vm478, %v1223, 0
        %v1231 = vsel %vm541, %v1226, 0
        %1233 = vmatprep.subr.bf16.mxu0 0
        %1234 = vmatpush1.bf16.msra.mxu0 %v1231
        %1235 = vmatprep.subr.bf16.mxu0 0
        %1236 = vmatpush1.bf16.msra.mxu0 0
        %1237 = vmatprep.subr.bf16.mxu0 0
        %1238 = vmatpush1.bf16.msra.mxu0 0
        %1239 = vmatprep.subr.bf16.mxu0 0
        %1240 = vmatpush1.bf16.msra.mxu0 0
        %1241 = vmatprep.subr.bf16.mxu0 0
        %1242 = vmatpush1.bf16.msra.mxu0 0
        %1243 = vmatprep.subr.bf16.mxu0 0
        %1244 = vmatpush1.bf16.msra.mxu0 0
        %1245 = vmatprep.subr.bf16.mxu0 0
        %1246 = vmatpush1.bf16.msra.mxu0 0
        %1247 = vmatprep.subr.bf16.mxu0 0
        %1248 = vmatpush1.bf16.msra.mxu0 0
        %1249 = vmatprep.subr.bf16.mxu0 0
        %1250 = vmatpush1.bf16.msra.mxu0 0
        %1251 = vmatprep.subr.bf16.mxu0 0
        %1252 = vmatpush1.bf16.msra.mxu0 0
        %1253 = vmatprep.subr.bf16.mxu0 0
        %1254 = vmatpush1.bf16.msra.mxu0 0
        %1255 = vmatprep.subr.bf16.mxu0 0
        %1256 = vmatpush1.bf16.msra.mxu0 0
        %1257 = vmatprep.subr.bf16.mxu0 0
        %1258 = vmatpush1.bf16.msra.mxu0 0
        %1259 = vmatprep.subr.bf16.mxu0 0
        %1260 = vmatpush1.bf16.msra.mxu0 0
        %1261 = vmatprep.subr.bf16.mxu0 0
        %1262 = vmatpush1.bf16.msra.mxu0 0
        %1263 = vmatprep.subr.bf16.mxu0 0
        %1264 = vmatpush1.bf16.msra.mxu0 0
        %1265 = vmatprep.mubr.bf16.mxu0 0
        %1266 = vmatmul.mubr.bf16.gmra.mrb[0].mxu0 %v1228
        %v1267 = vpop.f32.mrb[0].mxu0
        %v1268 = vadd.f32 0.0, %v1267
        %v1269 = vpop.f32.mrb[0].mxu0
        %v1270 = vpop.f32.mrb[0].mxu0
        %v1271 = vpop.f32.mrb[0].mxu0
        %1272 = vdwg.mxu0
        %v1273 = vmul.f32 %v1268, %v1222
        %v1274 = vpack.c.bf16 %v1273, %v1273
        %1275 = vst.msk [vmem:[#allocation2] sm:$0xf] %vm587, %v1274
        %1277 = vrot.lane.b32.xlu0 %v1101, 120
        %v1278 = vpop.permute.xlu0 %1277
        %1279 = vrot.lane.b32.xlu0 %v1166, 120
        %v1280 = vpop.permute.xlu0 %1279
        %v1282 = vsel %vm478, %v1278, 0
        %v1285 = vsel %vm478, %v1280, 0
        %1287 = vmatprep.subr.bf16.mxu0 0
        %1288 = vmatpush1.bf16.xpose.msra.mxu0 %v1285
        %1289 = vmatprep.subr.bf16.mxu0 0
        %1290 = vmatpush1.bf16.xpose.msra.mxu0 0
        %1291 = vmatprep.subr.bf16.mxu0 0
        %1292 = vmatpush1.bf16.xpose.msra.mxu0 0
        %1293 = vmatprep.subr.bf16.mxu0 0
        %1294 = vmatpush1.bf16.xpose.msra.mxu0 0
        %1295 = vmatprep.subr.bf16.mxu0 0
        %1296 = vmatpush1.bf16.xpose.msra.mxu0 0
        %1297 = vmatprep.subr.bf16.mxu0 0
        %1298 = vmatpush1.bf16.xpose.msra.mxu0 0
        %1299 = vmatprep.subr.bf16.mxu0 0
        %1300 = vmatpush1.bf16.xpose.msra.mxu0 0
        %1301 = vmatprep.subr.bf16.mxu0 0
        %1302 = vmatpush1.bf16.xpose.msra.mxu0 0
        %1303 = vmatprep.subr.bf16.mxu0 0
        %1304 = vmatpush1.bf16.xpose.msra.mxu0 0
        %1305 = vmatprep.subr.bf16.mxu0 0
        %1306 = vmatpush1.bf16.xpose.msra.mxu0 0
        %1307 = vmatprep.subr.bf16.mxu0 0
        %1308 = vmatpush1.bf16.xpose.msra.mxu0 0
        %1309 = vmatprep.subr.bf16.mxu0 0
        %1310 = vmatpush1.bf16.xpose.msra.mxu0 0
        %1311 = vmatprep.subr.bf16.mxu0 0
        %1312 = vmatpush1.bf16.xpose.msra.mxu0 0
        %1313 = vmatprep.subr.bf16.mxu0 0
        %1314 = vmatpush1.bf16.xpose.msra.mxu0 0
        %1315 = vmatprep.subr.bf16.mxu0 0
        %1316 = vmatpush1.bf16.xpose.msra.mxu0 0
        %1317 = vmatprep.subr.bf16.mxu0 0
        %1318 = vmatpush1.bf16.xpose.msra.mxu0 0
        %1319 = vmatprep.mubr.bf16.mxu0 0
        %1320 = vmatmul.mubr.bf16.gmra.mrb[0].mxu0 %v1282
        %v1321 = vpop.f32.mrb[0].mxu0
        %v1322 = vadd.f32 0.0, %v1321
        %v1323 = vpop.f32.mrb[0].mxu0
        %v1324 = vpop.f32.mrb[0].mxu0
        %v1325 = vpop.f32.mrb[0].mxu0
        %1326 = vdwg.mxu0
        %v1327 = vsel %vm478, %v1322, -inf
        %1328 = vmax.xlane.f32.xlu0 %v1327
        %v1329 = vpop.xlane.xlu0 %1328
        %v1330 = vsub.f32 %v1322, %v1329
        %v1331 = vmul.f32 %v1330, 1.442695
        %v1332 = vpow.pop %v1331
        %v1333 = vsel %vm478, %v1332, 0.0
        %1334 = vadd.xlane.f32.xlu0 %v1333
        %v1335 = vpop.xlane.xlu0 %1334
        %v1336 = vrcp.pop %v1335
        %v1337 = vpack.c.bf16 %v1332, %v1332
        %1338 = vrot.lane.b32.xlu0 %v1166, 88
        %v1339 = vpop.permute.xlu0 %1338
        %v1341 = vsel %vm478, %v1337, 0
        %v1344 = vsel %vm541, %v1339, 0
        %1346 = vmatprep.subr.bf16.mxu0 0
        %1347 = vmatpush1.bf16.msra.mxu0 %v1344
        %1348 = vmatprep.subr.bf16.mxu0 0
        %1349 = vmatpush1.bf16.msra.mxu0 0
        %1350 = vmatprep.subr.bf16.mxu0 0
        %1351 = vmatpush1.bf16.msra.mxu0 0
        %1352 = vmatprep.subr.bf16.mxu0 0
        %1353 = vmatpush1.bf16.msra.mxu0 0
        %1354 = vmatprep.subr.bf16.mxu0 0
        %1355 = vmatpush1.bf16.msra.mxu0 0
        %1356 = vmatprep.subr.bf16.mxu0 0
        %1357 = vmatpush1.bf16.msra.mxu0 0
        %1358 = vmatprep.subr.bf16.mxu0 0
        %1359 = vmatpush1.bf16.msra.mxu0 0
        %1360 = vmatprep.subr.bf16.mxu0 0
        %1361 = vmatpush1.bf16.msra.mxu0 0
        %1362 = vmatprep.subr.bf16.mxu0 0
        %1363 = vmatpush1.bf16.msra.mxu0 0
        %1364 = vmatprep.subr.bf16.mxu0 0
        %1365 = vmatpush1.bf16.msra.mxu0 0
        %1366 = vmatprep.subr.bf16.mxu0 0
        %1367 = vmatpush1.bf16.msra.mxu0 0
        %1368 = vmatprep.subr.bf16.mxu0 0
        %1369 = vmatpush1.bf16.msra.mxu0 0
        %1370 = vmatprep.subr.bf16.mxu0 0
        %1371 = vmatpush1.bf16.msra.mxu0 0
        %1372 = vmatprep.subr.bf16.mxu0 0
        %1373 = vmatpush1.bf16.msra.mxu0 0
        %1374 = vmatprep.subr.bf16.mxu0 0
        %1375 = vmatpush1.bf16.msra.mxu0 0
        %1376 = vmatprep.subr.bf16.mxu0 0
        %1377 = vmatpush1.bf16.msra.mxu0 0
        %1378 = vmatprep.mubr.bf16.mxu0 0
        %1379 = vmatmul.mubr.bf16.gmra.mrb[0].mxu0 %v1341
        %v1380 = vpop.f32.mrb[0].mxu0
        %v1381 = vadd.f32 0.0, %v1380
        %v1382 = vpop.f32.mrb[0].mxu0
        %v1383 = vpop.f32.mrb[0].mxu0
        %v1384 = vpop.f32.mrb[0].mxu0
        %1385 = vdwg.mxu0
        %v1386 = vmul.f32 %v1381, %v1336
        %v1387 = vpack.c.bf16 %v1386, %v1386
        %v1389 = vunpack.c.l.b16 %v1387
        %v1390 = vpack.c.b16 %v1389, %v1389
        %1391 = vrot.lane.b32.xlu0 %v1390, 8
        %v1392 = vpop.permute.xlu0 %1391
        %1394 = vst.msk [vmem:[#allocation2] sm:$0xf] %vm707, %v1392
        %1395 = vrot.lane.b32.xlu0 %v1101, 112
        %v1396 = vpop.permute.xlu0 %1395
        %1397 = vrot.lane.b32.xlu0 %v1166, 112
        %v1398 = vpop.permute.xlu0 %1397
        %v1400 = vsel %vm478, %v1396, 0
        %v1403 = vsel %vm478, %v1398, 0
        %1405 = vmatprep.subr.bf16.mxu0 0
        %1406 = vmatpush1.bf16.xpose.msra.mxu0 %v1403
        %1407 = vmatprep.subr.bf16.mxu0 0
        %1408 = vmatpush1.bf16.xpose.msra.mxu0 0
        %1409 = vmatprep.subr.bf16.mxu0 0
        %1410 = vmatpush1.bf16.xpose.msra.mxu0 0
        %1411 = vmatprep.subr.bf16.mxu0 0
        %1412 = vmatpush1.bf16.xpose.msra.mxu0 0
        %1413 = vmatprep.subr.bf16.mxu0 0
        %1414 = vmatpush1.bf16.xpose.msra.mxu0 0
        %1415 = vmatprep.subr.bf16.mxu0 0
        %1416 = vmatpush1.bf16.xpose.msra.mxu0 0
        %1417 = vmatprep.subr.bf16.mxu0 0
        %1418 = vmatpush1.bf16.xpose.msra.mxu0 0
        %1419 = vmatprep.subr.bf16.mxu0 0
        %1420 = vmatpush1.bf16.xpose.msra.mxu0 0
        %1421 = vmatprep.subr.bf16.mxu0 0
        %1422 = vmatpush1.bf16.xpose.msra.mxu0 0
        %1423 = vmatprep.subr.bf16.mxu0 0
        %1424 = vmatpush1.bf16.xpose.msra.mxu0 0
        %1425 = vmatprep.subr.bf16.mxu0 0
        %1426 = vmatpush1.bf16.xpose.msra.mxu0 0
        %1427 = vmatprep.subr.bf16.mxu0 0
        %1428 = vmatpush1.bf16.xpose.msra.mxu0 0
        %1429 = vmatprep.subr.bf16.mxu0 0
        %1430 = vmatpush1.bf16.xpose.msra.mxu0 0
        %1431 = vmatprep.subr.bf16.mxu0 0
        %1432 = vmatpush1.bf16.xpose.msra.mxu0 0
        %1433 = vmatprep.subr.bf16.mxu0 0
        %1434 = vmatpush1.bf16.xpose.msra.mxu0 0
        %1435 = vmatprep.subr.bf16.mxu0 0
        %1436 = vmatpush1.bf16.xpose.msra.mxu0 0
        %1437 = vmatprep.mubr.bf16.mxu0 0
        %1438 = vmatmul.mubr.bf16.gmra.mrb[0].mxu0 %v1400
        %v1439 = vpop.f32.mrb[0].mxu0
        %v1440 = vadd.f32 0.0, %v1439
        %v1441 = vpop.f32.mrb[0].mxu0
        %v1442 = vpop.f32.mrb[0].mxu0
        %v1443 = vpop.f32.mrb[0].mxu0
        %1444 = vdwg.mxu0
        %v1445 = vsel %vm478, %v1440, -inf
        %1446 = vmax.xlane.f32.xlu0 %v1445
        %v1447 = vpop.xlane.xlu0 %1446
        %v1448 = vsub.f32 %v1440, %v1447
        %v1449 = vmul.f32 %v1448, 1.442695
        %v1450 = vpow.pop %v1449
        %v1451 = vsel %vm478, %v1450, 0.0
        %1452 = vadd.xlane.f32.xlu0 %v1451
        %v1453 = vpop.xlane.xlu0 %1452
        %v1454 = vrcp.pop %v1453
        %v1455 = vpack.c.bf16 %v1450, %v1450
        %1456 = vrot.lane.b32.xlu0 %v1166, 80
        %v1457 = vpop.permute.xlu0 %1456
        %v1459 = vsel %vm478, %v1455, 0
        %v1462 = vsel %vm541, %v1457, 0
        %1464 = vmatprep.subr.bf16.mxu0 0
        %1465 = vmatpush1.bf16.msra.mxu0 %v1462
        %1466 = vmatprep.subr.bf16.mxu0 0
        %1467 = vmatpush1.bf16.msra.mxu0 0
        %1468 = vmatprep.subr.bf16.mxu0 0
        %1469 = vmatpush1.bf16.msra.mxu0 0
        %1470 = vmatprep.subr.bf16.mxu0 0
        %1471 = vmatpush1.bf16.msra.mxu0 0
        %1472 = vmatprep.subr.bf16.mxu0 0
        %1473 = vmatpush1.bf16.msra.mxu0 0
        %1474 = vmatprep.subr.bf16.mxu0 0
        %1475 = vmatpush1.bf16.msra.mxu0 0
        %1476 = vmatprep.subr.bf16.mxu0 0
        %1477 = vmatpush1.bf16.msra.mxu0 0
        %1478 = vmatprep.subr.bf16.mxu0 0
        %1479 = vmatpush1.bf16.msra.mxu0 0
        %1480 = vmatprep.subr.bf16.mxu0 0
        %1481 = vmatpush1.bf16.msra.mxu0 0
        %1482 = vmatprep.subr.bf16.mxu0 0
        %1483 = vmatpush1.bf16.msra.mxu0 0
        %1484 = vmatprep.subr.bf16.mxu0 0
        %1485 = vmatpush1.bf16.msra.mxu0 0
        %1486 = vmatprep.subr.bf16.mxu0 0
        %1487 = vmatpush1.bf16.msra.mxu0 0
        %1488 = vmatprep.subr.bf16.mxu0 0
        %1489 = vmatpush1.bf16.msra.mxu0 0
        %1490 = vmatprep.subr.bf16.mxu0 0
        %1491 = vmatpush1.bf16.msra.mxu0 0
        %1492 = vmatprep.subr.bf16.mxu0 0
        %1493 = vmatpush1.bf16.msra.mxu0 0
        %1494 = vmatprep.subr.bf16.mxu0 0
        %1495 = vmatpush1.bf16.msra.mxu0 0
        %1496 = vmatprep.mubr.bf16.mxu0 0
        %1497 = vmatmul.mubr.bf16.gmra.mrb[0].mxu0 %v1459
        %v1498 = vpop.f32.mrb[0].mxu0
        %v1499 = vadd.f32 0.0, %v1498
        %v1500 = vpop.f32.mrb[0].mxu0
        %v1501 = vpop.f32.mrb[0].mxu0
        %v1502 = vpop.f32.mrb[0].mxu0
        %1503 = vdwg.mxu0
        %v1504 = vmul.f32 %v1499, %v1454
        %v1505 = vpack.c.bf16 %v1504, %v1504
        %v1507 = vunpack.c.l.b16 %v1505
        %v1508 = vpack.c.b16 %v1507, %v1507
        %1509 = vrot.lane.b32.xlu0 %v1508, 16
        %v1510 = vpop.permute.xlu0 %1509
        %1512 = vst.msk [vmem:[#allocation2] sm:$0xf] %vm826, %v1510
        %1513 = vrot.lane.b32.xlu0 %v1101, 104
        %v1514 = vpop.permute.xlu0 %1513
        %1515 = vrot.lane.b32.xlu0 %v1166, 104
        %v1516 = vpop.permute.xlu0 %1515
        %v1518 = vsel %vm478, %v1514, 0
        %v1521 = vsel %vm478, %v1516, 0
        %1523 = vmatprep.subr.bf16.mxu0 0
        %1524 = vmatpush1.bf16.xpose.msra.mxu0 %v1521
        %1525 = vmatprep.subr.bf16.mxu0 0
        %1526 = vmatpush1.bf16.xpose.msra.mxu0 0
        %1527 = vmatprep.subr.bf16.mxu0 0
        %1528 = vmatpush1.bf16.xpose.msra.mxu0 0
        %1529 = vmatprep.subr.bf16.mxu0 0
        %1530 = vmatpush1.bf16.xpose.msra.mxu0 0
        %1531 = vmatprep.subr.bf16.mxu0 0
        %1532 = vmatpush1.bf16.xpose.msra.mxu0 0
        %1533 = vmatprep.subr.bf16.mxu0 0
        %1534 = vmatpush1.bf16.xpose.msra.mxu0 0
        %1535 = vmatprep.subr.bf16.mxu0 0
        %1536 = vmatpush1.bf16.xpose.msra.mxu0 0
        %1537 = vmatprep.subr.bf16.mxu0 0
        %1538 = vmatpush1.bf16.xpose.msra.mxu0 0
        %1539 = vmatprep.subr.bf16.mxu0 0
        %1540 = vmatpush1.bf16.xpose.msra.mxu0 0
        %1541 = vmatprep.subr.bf16.mxu0 0
        %1542 = vmatpush1.bf16.xpose.msra.mxu0 0
        %1543 = vmatprep.subr.bf16.mxu0 0
        %1544 = vmatpush1.bf16.xpose.msra.mxu0 0
        %1545 = vmatprep.subr.bf16.mxu0 0
        %1546 = vmatpush1.bf16.xpose.msra.mxu0 0
        %1547 = vmatprep.subr.bf16.mxu0 0
        %1548 = vmatpush1.bf16.xpose.msra.mxu0 0
        %1549 = vmatprep.subr.bf16.mxu0 0
        %1550 = vmatpush1.bf16.xpose.msra.mxu0 0
        %1551 = vmatprep.subr.bf16.mxu0 0
        %1552 = vmatpush1.bf16.xpose.msra.mxu0 0
        %1553 = vmatprep.subr.bf16.mxu0 0
        %1554 = vmatpush1.bf16.xpose.msra.mxu0 0
        %1555 = vmatprep.mubr.bf16.mxu0 0
        %1556 = vmatmul.mubr.bf16.gmra.mrb[0].mxu0 %v1518
        %v1557 = vpop.f32.mrb[0].mxu0
        %v1558 = vadd.f32 0.0, %v1557
        %v1559 = vpop.f32.mrb[0].mxu0
        %v1560 = vpop.f32.mrb[0].mxu0
        %v1561 = vpop.f32.mrb[0].mxu0
        %1562 = vdwg.mxu0
        %v1563 = vsel %vm478, %v1558, -inf
        %1564 = vmax.xlane.f32.xlu0 %v1563
        %v1565 = vpop.xlane.xlu0 %1564
        %v1566 = vsub.f32 %v1558, %v1565
        %v1567 = vmul.f32 %v1566, 1.442695
        %v1568 = vpow.pop %v1567
        %v1569 = vsel %vm478, %v1568, 0.0
        %1570 = vadd.xlane.f32.xlu0 %v1569
        %v1571 = vpop.xlane.xlu0 %1570
        %v1572 = vrcp.pop %v1571
        %v1573 = vpack.c.bf16 %v1568, %v1568
        %1574 = vrot.lane.b32.xlu0 %v1166, 72
        %v1575 = vpop.permute.xlu0 %1574
        %v1577 = vsel %vm478, %v1573, 0
        %v1580 = vsel %vm541, %v1575, 0
        %1582 = vmatprep.subr.bf16.mxu0 0
        %1583 = vmatpush1.bf16.msra.mxu0 %v1580
        %1584 = vmatprep.subr.bf16.mxu0 0
        %1585 = vmatpush1.bf16.msra.mxu0 0
        %1586 = vmatprep.subr.bf16.mxu0 0
        %1587 = vmatpush1.bf16.msra.mxu0 0
        %1588 = vmatprep.subr.bf16.mxu0 0
        %1589 = vmatpush1.bf16.msra.mxu0 0
        %1590 = vmatprep.subr.bf16.mxu0 0
        %1591 = vmatpush1.bf16.msra.mxu0 0
        %1592 = vmatprep.subr.bf16.mxu0 0
        %1593 = vmatpush1.bf16.msra.mxu0 0
        %1594 = vmatprep.subr.bf16.mxu0 0
        %1595 = vmatpush1.bf16.msra.mxu0 0
        %1596 = vmatprep.subr.bf16.mxu0 0
        %1597 = vmatpush1.bf16.msra.mxu0 0
        %1598 = vmatprep.subr.bf16.mxu0 0
        %1599 = vmatpush1.bf16.msra.mxu0 0
        %1600 = vmatprep.subr.bf16.mxu0 0
        %1601 = vmatpush1.bf16.msra.mxu0 0
        %1602 = vmatprep.subr.bf16.mxu0 0
        %1603 = vmatpush1.bf16.msra.mxu0 0
        %1604 = vmatprep.subr.bf16.mxu0 0
        %1605 = vmatpush1.bf16.msra.mxu0 0
        %1606 = vmatprep.subr.bf16.mxu0 0
        %1607 = vmatpush1.bf16.msra.mxu0 0
        %1608 = vmatprep.subr.bf16.mxu0 0
        %1609 = vmatpush1.bf16.msra.mxu0 0
        %1610 = vmatprep.subr.bf16.mxu0 0
        %1611 = vmatpush1.bf16.msra.mxu0 0
        %1612 = vmatprep.subr.bf16.mxu0 0
        %1613 = vmatpush1.bf16.msra.mxu0 0
        %1614 = vmatprep.mubr.bf16.mxu0 0
        %1615 = vmatmul.mubr.bf16.gmra.mrb[0].mxu0 %v1577
        %v1616 = vpop.f32.mrb[0].mxu0
        %v1617 = vadd.f32 0.0, %v1616
        %v1618 = vpop.f32.mrb[0].mxu0
        %v1619 = vpop.f32.mrb[0].mxu0
        %v1620 = vpop.f32.mrb[0].mxu0
        %1621 = vdwg.mxu0
        %v1622 = vmul.f32 %v1617, %v1572
        %v1623 = vpack.c.bf16 %v1622, %v1622
        %v1625 = vunpack.c.l.b16 %v1623
        %v1626 = vpack.c.b16 %v1625, %v1625
        %1627 = vrot.lane.b32.xlu0 %v1626, 24
        %v1628 = vpop.permute.xlu0 %1627
        %1630 = vst.msk [vmem:[#allocation2] sm:$0xf] %vm945, %v1628
        %v1631 = vld [vmem:[#allocation2] sm:$0xf]
        %v1632 = vld [vmem:[#allocation3] sm:$0xf]
        %v1633 = vld [vmem:[#allocation3 + $0x4] sm:$0xf]
        %v1634 = vld [vmem:[#allocation3 + $0x8] sm:$0xf]
        %v1635 = vld [vmem:[#allocation3 + $0xc] sm:$0xf]
        %v1636 = vlaneseq
        %v1637 = vshrl.u32 %v1636, 7
        %v1638 = vsub.s32 6, %v1637
        %v1639 = vrot.slane %v405, %v1638
        %v1644 = vunpack.c.l.b16 %v1632
        %v1645 = vunpack.c.l.b16 %v1633
        %v1646 = vunpack.c.l.b16 %v1634
        %v1647 = vunpack.c.l.b16 %v1635
        %v1648 = vpack.c.b16 %v1645, %v1644
        %v1649 = vpack.c.b16 %v1647, %v1646
        %v1653 = vsel %vm428, %v1631, 0
        %1655 = vmatprep.subr.bf16.mxu0 0
        %1656 = vmatpush1.bf16.msra.mxu0 %v1648
        %1657 = vmatprep.subr.bf16.mxu0 0
        %1658 = vmatpush1.bf16.msra.mxu0 %v1649
        %1659 = vmatprep.subr.bf16.mxu0 0
        %1660 = vmatpush1.bf16.msra.mxu0 0
        %1661 = vmatprep.subr.bf16.mxu0 0
        %1662 = vmatpush1.bf16.msra.mxu0 0
        %1663 = vmatprep.subr.bf16.mxu0 0
        %1664 = vmatpush1.bf16.msra.mxu0 0
        %1665 = vmatprep.subr.bf16.mxu0 0
        %1666 = vmatpush1.bf16.msra.mxu0 0
        %1667 = vmatprep.subr.bf16.mxu0 0
        %1668 = vmatpush1.bf16.msra.mxu0 0
        %1669 = vmatprep.subr.bf16.mxu0 0
        %1670 = vmatpush1.bf16.msra.mxu0 0
        %1671 = vmatprep.subr.bf16.mxu0 0
        %1672 = vmatpush1.bf16.msra.mxu0 0
        %1673 = vmatprep.subr.bf16.mxu0 0
        %1674 = vmatpush1.bf16.msra.mxu0 0
        %1675 = vmatprep.subr.bf16.mxu0 0
        %1676 = vmatpush1.bf16.msra.mxu0 0
        %1677 = vmatprep.subr.bf16.mxu0 0
        %1678 = vmatpush1.bf16.msra.mxu0 0
        %1679 = vmatprep.subr.bf16.mxu0 0
        %1680 = vmatpush1.bf16.msra.mxu0 0
        %1681 = vmatprep.subr.bf16.mxu0 0
        %1682 = vmatpush1.bf16.msra.mxu0 0
        %1683 = vmatprep.subr.bf16.mxu0 0
        %1684 = vmatpush1.bf16.msra.mxu0 0
        %1685 = vmatprep.subr.bf16.mxu0 0
        %1686 = vmatpush1.bf16.msra.mxu0 0
        %1687 = vmatprep.mubr.bf16.mxu0 0
        %1688 = vmatmul.mubr.bf16.gmra.mrb[0].mxu0 %v1653
        %v1689 = vpop.f32.mrb[0].mxu0
        %v1690 = vadd.f32 %v1639, %v1689
        %v1691 = vpop.f32.mrb[0].mxu0
        %v1692 = vpop.f32.mrb[0].mxu0
        %v1693 = vpop.f32.mrb[0].mxu0
        %1694 = vdwg.mxu0
        %v1695 = vadd.f32 %v1035, %v1690
        %v1696 = vsel %vm428, %v1695, 0.0
        %1697 = vadd.xlane.f32.xlu0 %v1696
        %v1698 = vpop.xlane.xlu0 %1697
        %v1699 = vmul.f32 %v1698, %v1015
        %v1700 = vsub.f32 %v1695, %v1699
        %v1701 = vmul.f32 %v1700, %v1700
        %v1702 = vsel %vm428, %v1701, 0.0
        %1703 = vadd.xlane.f32.xlu0 %v1702
        %v1704 = vpop.xlane.xlu0 %1703
        %v1705 = vmul.f32 %v1704, %v1015
        %v1706 = vadd.f32 %v1705, 1e-05
        %v1707 = vrsqrt.pop %v1706
        %v1708 = vmul.f32 %v1700, %v1707
        %v1709 = vlaneseq
        %v1710 = vshrl.u32 %v1709, 7
        %v1711 = vsub.s32 7, %v1710
        %v1712 = vrot.slane %v405, %v1711
        %v1713 = vmul.f32 %v1708, %v1712
        %v1714 = vlaneseq
        %v1715 = vshrl.u32 %v1714, 7
        %v1716 = vsub.s32 0, %v1715
        %v1717 = vrot.slane %v406, %v1716
        %v1718 = vadd.f32 %v1713, %v1717
        %v1719 = vpack.c.bf16 %v1718, %v1718
        %v1720 = vld [vmem:[#allocation6] sm:$0xf]
        %v1721 = vld [vmem:[#allocation6 + $0x4] sm:$0xf]
        %v1722 = vld [vmem:[#allocation6 + $0x8] sm:$0xf]
        %v1723 = vld [vmem:[#allocation6 + $0xc] sm:$0xf]
        %v1724 = vlaneseq
        %v1725 = vshrl.u32 %v1724, 7
        %v1726 = vsub.s32 1, %v1725
        %v1727 = vrot.slane %v406, %v1726
        %v1732 = vunpack.c.l.b16 %v1720
        %v1733 = vunpack.c.l.b16 %v1721
        %v1734 = vunpack.c.l.b16 %v1722
        %v1735 = vunpack.c.l.b16 %v1723
        %v1736 = vpack.c.b16 %v1733, %v1732
        %v1737 = vpack.c.b16 %v1735, %v1734
        %v1741 = vsel %vm428, %v1719, 0
        %1743 = vmatprep.subr.bf16.mxu0 0
        %1744 = vmatpush1.bf16.msra.mxu0 %v1736
        %1745 = vmatprep.subr.bf16.mxu0 0
        %1746 = vmatpush1.bf16.msra.mxu0 %v1737
        %1747 = vmatprep.subr.bf16.mxu0 0
        %1748 = vmatpush1.bf16.msra.mxu0 0
        %1749 = vmatprep.subr.bf16.mxu0 0
        %1750 = vmatpush1.bf16.msra.mxu0 0
        %1751 = vmatprep.subr.bf16.mxu0 0
        %1752 = vmatpush1.bf16.msra.mxu0 0
        %1753 = vmatprep.subr.bf16.mxu0 0
        %1754 = vmatpush1.bf16.msra.mxu0 0
        %1755 = vmatprep.subr.bf16.mxu0 0
        %1756 = vmatpush1.bf16.msra.mxu0 0
        %1757 = vmatprep.subr.bf16.mxu0 0
        %1758 = vmatpush1.bf16.msra.mxu0 0
        %1759 = vmatprep.subr.bf16.mxu0 0
        %1760 = vmatpush1.bf16.msra.mxu0 0
        %1761 = vmatprep.subr.bf16.mxu0 0
        %1762 = vmatpush1.bf16.msra.mxu0 0
        %1763 = vmatprep.subr.bf16.mxu0 0
        %1764 = vmatpush1.bf16.msra.mxu0 0
        %1765 = vmatprep.subr.bf16.mxu0 0
        %1766 = vmatpush1.bf16.msra.mxu0 0
        %1767 = vmatprep.subr.bf16.mxu0 0
        %1768 = vmatpush1.bf16.msra.mxu0 0
        %1769 = vmatprep.subr.bf16.mxu0 0
        %1770 = vmatpush1.bf16.msra.mxu0 0
        %1771 = vmatprep.subr.bf16.mxu0 0
        %1772 = vmatpush1.bf16.msra.mxu0 0
        %1773 = vmatprep.subr.bf16.mxu0 0
        %1774 = vmatpush1.bf16.msra.mxu0 0
        %1775 = vmatprep.mubr.bf16.mxu0 0
        %1776 = vmatmul.mubr.bf16.gmra.mrb[0].mxu0 %v1741
        %v1777 = vpop.f32.mrb[0].mxu0
        %v1778 = vadd.f32 %v1727, %v1777
        %v1779 = vpop.f32.mrb[0].mxu0
        %v1780 = vpop.f32.mrb[0].mxu0
        %v1781 = vpop.f32.mrb[0].mxu0
        %1782 = vdwg.mxu0
        %v1783 = vmax.f32 %v1778, 0.0
        %v1784 = vpack.c.bf16 %v1783, %v1783
        %v1785 = vld [vmem:[%s8] sm:$0xf]
        %v1786 = vld [vmem:[%s8 + $0x4] sm:$0xf]
        %v1787 = vld [vmem:[%s8 + $0x8] sm:$0xf]
        %v1788 = vld [vmem:[%s8 + $0xc] sm:$0xf]
        %v1789 = vld [vmem:[%s8 + $0x10] sm:$0xf]
        %v1790 = vld [vmem:[%s8 + $0x14] sm:$0xf]
        %v1791 = vld [vmem:[%s8 + $0x18] sm:$0xf]
        %v1792 = vld [vmem:[%s8 + $0x1c] sm:$0xf]
        %v1793 = vld [vmem:[%s8 + $0x20] sm:$0xf]
        %v1794 = vld [vmem:[%s8 + $0x24] sm:$0xf]
        %v1795 = vld [vmem:[%s8 + $0x28] sm:$0xf]
        %v1796 = vld [vmem:[%s8 + $0x2c] sm:$0xf]
        %v1797 = vld [vmem:[%s8 + $0x30] sm:$0xf]
        %v1798 = vld [vmem:[%s8 + $0x34] sm:$0xf]
        %v1799 = vld [vmem:[%s8 + $0x38] sm:$0xf]
        %v1800 = vld [vmem:[%s8 + $0x3c] sm:$0xf]
        %v1801 = vlaneseq
        %v1802 = vshrl.u32 %v1801, 7
        %v1803 = vsub.s32 2, %v1802
        %v1804 = vrot.slane %v406, %v1803
        %v1821 = vunpack.c.l.b16 %v1785
        %v1822 = vunpack.c.l.b16 %v1786
        %v1823 = vunpack.c.l.b16 %v1787
        %v1824 = vunpack.c.l.b16 %v1788
        %v1825 = vunpack.c.l.b16 %v1789
        %v1826 = vunpack.c.l.b16 %v1790
        %v1827 = vunpack.c.l.b16 %v1791
        %v1828 = vunpack.c.l.b16 %v1792
        %v1829 = vunpack.c.l.b16 %v1793
        %v1830 = vunpack.c.l.b16 %v1794
        %v1831 = vunpack.c.l.b16 %v1795
        %v1832 = vunpack.c.l.b16 %v1796
        %v1833 = vunpack.c.l.b16 %v1797
        %v1834 = vunpack.c.l.b16 %v1798
        %v1835 = vunpack.c.l.b16 %v1799
        %v1836 = vunpack.c.l.b16 %v1800
        %v1837 = vpack.c.b16 %v1822, %v1821
        %v1838 = vpack.c.b16 %v1824, %v1823
        %v1839 = vpack.c.b16 %v1826, %v1825
        %v1840 = vpack.c.b16 %v1828, %v1827
        %v1841 = vpack.c.b16 %v1830, %v1829
        %v1842 = vpack.c.b16 %v1832, %v1831
        %v1843 = vpack.c.b16 %v1834, %v1833
        %v1844 = vpack.c.b16 %v1836, %v1835
        %1853 = vmatprep.subr.bf16.mxu0 0
        %1854 = vmatpush1.bf16.msra.mxu0 %v1837
        %1855 = vmatprep.subr.bf16.mxu0 0
        %1856 = vmatpush1.bf16.msra.mxu0 %v1838
        %1857 = vmatprep.subr.bf16.mxu0 0
        %1858 = vmatpush1.bf16.msra.mxu0 %v1839
        %1859 = vmatprep.subr.bf16.mxu0 0
        %1860 = vmatpush1.bf16.msra.mxu0 %v1840
        %1861 = vmatprep.subr.bf16.mxu0 0
        %1862 = vmatpush1.bf16.msra.mxu0 %v1841
        %1863 = vmatprep.subr.bf16.mxu0 0
        %1864 = vmatpush1.bf16.msra.mxu0 %v1842
        %1865 = vmatprep.subr.bf16.mxu0 0
        %1866 = vmatpush1.bf16.msra.mxu0 %v1843
        %1867 = vmatprep.subr.bf16.mxu0 0
        %1868 = vmatpush1.bf16.msra.mxu0 %v1844
        %1869 = vmatprep.subr.bf16.mxu0 0
        %1870 = vmatpush1.bf16.msra.mxu0 0
        %1871 = vmatprep.subr.bf16.mxu0 0
        %1872 = vmatpush1.bf16.msra.mxu0 0
        %1873 = vmatprep.subr.bf16.mxu0 0
        %1874 = vmatpush1.bf16.msra.mxu0 0
        %1875 = vmatprep.subr.bf16.mxu0 0
        %1876 = vmatpush1.bf16.msra.mxu0 0
        %1877 = vmatprep.subr.bf16.mxu0 0
        %1878 = vmatpush1.bf16.msra.mxu0 0
        %1879 = vmatprep.subr.bf16.mxu0 0
        %1880 = vmatpush1.bf16.msra.mxu0 0
        %1881 = vmatprep.subr.bf16.mxu0 0
        %1882 = vmatpush1.bf16.msra.mxu0 0
        %1883 = vmatprep.subr.bf16.mxu0 0
        %1884 = vmatpush1.bf16.msra.mxu0 0
        %1885 = vmatprep.mubr.bf16.mxu0 0
        %1886 = vmatmul.mubr.bf16.gmra.mrb[0].mxu0 %v1784
        %v1887 = vpop.f32.mrb[0].mxu0
        %v1888 = vadd.f32 %v1804, %v1887
        %v1889 = vpop.f32.mrb[0].mxu0
        %v1890 = vpop.f32.mrb[0].mxu0
        %v1891 = vpop.f32.mrb[0].mxu0
        %1892 = vdwg.mxu0
        %v1893 = vadd.f32 %v1718, %v1888
        %v1894 = vsel %vm428, %v1893, 0.0
        %1895 = vadd.xlane.f32.xlu0 %v1894
        %v1896 = vpop.xlane.xlu0 %1895
        %v1897 = vmul.f32 %v1896, %v1015
        %v1898 = vsub.f32 %v1893, %v1897
        %v1899 = vmul.f32 %v1898, %v1898
        %v1900 = vsel %vm428, %v1899, 0.0
        %1901 = vadd.xlane.f32.xlu0 %v1900
        %v1902 = vpop.xlane.xlu0 %1901
        %v1903 = vmul.f32 %v1902, %v1015
        %v1904 = vadd.f32 %v1903, 1e-05
        %v1905 = vrsqrt.pop %v1904
        %v1906 = vmul.f32 %v1898, %v1905
        %v1907 = vlaneseq
        %v1908 = vshrl.u32 %v1907, 7
        %v1909 = vsub.s32 3, %v1908
        %v1910 = vrot.slane %v406, %v1909
        %v1911 = vmul.f32 %v1906, %v1910
        %v1912 = vlaneseq
        %v1913 = vshrl.u32 %v1912, 7
        %v1914 = vsub.s32 4, %v1913
        %v1915 = vrot.slane %v406, %v1914
        %v1916 = vadd.f32 %v1911, %v1915
        %1917 = vst.msk [vmem:[%s393] sm:$0xff] %vm428, %v1916
        %s1918 = sand.u32 %s254, 1
        %s1919 = scalar_lea.sflag [#allocation5], %s1918
        %s1920 = sand.u32 %s254, 1
        %s1921 = smul.addr %s1920, 8
        %s1922 = scalar_lea.vmem [#allocation8], %s1921
        // Predicated region
        $region69: #{tpu_custom_call.1} parent=59 // pred_check
          %p1923 = pneg %p264
        $region70: #{tpu_custom_call.1} parent=59 // pred_check_branch
          %1925 = sbr.rel (%p1923) target = $region72
        $region71: #{tpu_custom_call.1} parent=59 // pred_region
          %s1927 = ssub.s32 128, 128
          %1928 = vsyncadd %s1919, %s1927
          %s1929 = smul.addr %s26, 128
          %s1930 = scalar_lea.hbm %s10, %s1929
          %s1932 = sshll.u32 %s1922, 4
          %s1933 = int_to_ptr.vmem [resolvable:$true] %s1932
          %1935 = dma.vmem_to_hbm [thread:$0]  %s1933, 128, %s1930, %s1919
        $region72: #{tpu_custom_call.1} parent=59 // pred_fallthru
          _
      $region60: #{tpu_custom_call.1} parent=5 // pred_fallthru
        _
      %p1936 = scmp.le.s32.totalorder 2, %s21
      // Predicated region
      $region73: #{tpu_custom_call.1} parent=5 // pred_check
        %p1937 = pneg %p1936
      $region74: #{tpu_custom_call.1} parent=5 // pred_check_branch
        %1939 = sbr.rel (%p1937) target = $region76
      $region75: #{tpu_custom_call.1} parent=5 // pred_region
        %s1940 = ssub.s32 %s21, 2
        // Predicated region
        $region77: #{tpu_custom_call.1} parent=75 // pred_check
          %p1941 = pneg %p270
        $region78: #{tpu_custom_call.1} parent=75 // pred_check_branch
          %1943 = sbr.rel (%p1941) target = $region80
        $region79: #{tpu_custom_call.1} parent=75 // pred_region
          %s1944 = sand.u32 %s255, 1
          %s1945 = scalar_lea.sflag [#allocation5], %s1944
          %s1946 = sand.u32 %s255, 1
          %s1947 = smul.addr %s1946, 8
          %s1948 = scalar_lea.vmem [#allocation8], %s1947
          %1949 = dma.done %s1945, 128
        $region80: #{tpu_custom_call.1} parent=75 // pred_fallthru
          _
      $region76: #{tpu_custom_call.1} parent=5 // pred_fallthru
        _
    $region6: #{tpu_custom_call.1} parent=1 // loop_footer
      %s25 = sadd.s32 1, %s21
    $region7: #{tpu_custom_call.1} parent=1 // loop_footer_branch
      %20 = sbr.rel target = $region3
    $region8: #{tpu_custom_call.1} parent=1 // loop_exit
      _
    %1950 = vsyncpa [#allocation4], 1
    %s1951 = scalar_lea.sflag [#allocation4], 1
    %1952 = vsyncpa %s1951, 1
    %1953 = vsyncpa [#allocation7], 1
    %1954 = vsyncpa [#allocation5], 1
    %s1955 = scalar_lea.sflag [#allocation5], 1
    %1956 = vsyncpa %s1955, 1

</llo_original>
